<compile_context>
chip_gen: v5e
topology: v5e:2x2
jax: 0.10.0
libtpu: 0.0.40
codegen_flags: <defaults>
</compile_context>

<pallas_src>
import jax
import jax.numpy as jnp
from jax import lax
from jax.experimental import pallas as pl
from jax.experimental.pallas import tpu as pltpu

# ------------------------- model config (small BERT) -------------------------
HIDDEN = 128            # stand-in for 768 (synthetic pretrained encoder)
NUM_HEADS = 4
HEAD_DIM = HIDDEN // NUM_HEADS
FFN = 4 * HIDDEN
NUM_LAYERS = 2
VOCAB = 100
MAX_POS = 16
NUM_SENTIMENT = 3
NUM_LABELS = 4
LN_EPS = 1e-12

_SQRT_HALF = 0.7071067811865476


# --------------------------- in-kernel math helpers ---------------------------
def _layernorm(x, g, b):
    """LayerNorm over the last axis; x:(S,H) f32, g/b broadcastable."""
    mu = jnp.mean(x, axis=-1, keepdims=True)
    var = jnp.mean(jnp.square(x - mu), axis=-1, keepdims=True)
    return (x - mu) * lax.rsqrt(var + LN_EPS) * g + b


def _erf_poly(x):
    # Abramowitz & Stegun 7.1.26 (|err| < 1.5e-7).  Uses only exp/mul/add/where
    # so it lowers on Mosaic regardless of lax.erf support.
    a1, a2, a3, a4, a5 = (0.254829592, -0.284496736, 1.421413741,
                          -1.453152027, 1.061405429)
    pc = 0.3275911
    ax = jnp.abs(x)
    t = 1.0 / (1.0 + pc * ax)
    poly = ((((a5 * t + a4) * t + a3) * t + a2) * t + a1) * t
    y = 1.0 - poly * jnp.exp(-ax * ax)
    return jnp.where(x < 0.0, -y, y)


def _gelu_exact(x):
    # HuggingFace BERT "gelu" = exact erf form (not the tanh approximation).
    return 0.5 * x * (1.0 + _erf_poly(x * _SQRT_HALF))


# ------------------------------ fused encoder kernel ---------------------------
def _fused_encoder_kernel(x_ref, mask_ref, emb_g_ref, emb_b_ref,
                          w_qkv_ref, b_qkv_ref, w_o_ref, b_o_ref,
                          ln1_g_ref, ln1_b_ref,
                          w_ff1_ref, b_ff1_ref, w_ff2_ref, b_ff2_ref,
                          ln2_g_ref, ln2_b_ref,
                          out_ref):
    """One grid step = (one batch element, one encoder layer).

    out_ref (1,S,H) is resident across the layer axis and carries the hidden
    state in VMEM; at layer 0 it is initialized with LayerNorm(embeddings)."""
    layer = pl.program_id(1)
    bf16 = jnp.bfloat16
    f32 = jnp.float32

    @pl.when(layer == 0)
    def _():
        x = x_ref[0].astype(f32)                                    # (S, H)
        out_ref[0] = _layernorm(x, emb_g_ref[...].astype(f32),
                                emb_b_ref[...].astype(f32)).astype(out_ref.dtype)

    h = out_ref[0].astype(f32)                                      # (S, H)
    mask_add = mask_ref[0].astype(f32)                              # (1, S) additive

    # ---- fused QKV projection: (S,H) @ (H,3H) -> (S,3H), bf16 MXU / f32 acc ----
    qkv = (jnp.dot(h.astype(bf16), w_qkv_ref[0],
                   preferred_element_type=f32)
           + b_qkv_ref[0].astype(f32))                              # (S, 3H)

    # ---- per-head attention via static lane slices (no reshape/transpose) ----
    scale = 1.0 / (float(HEAD_DIM) ** 0.5)
    ctx_heads = []
    for hd in range(NUM_HEADS):
        lo = hd * HEAD_DIM
        qh = qkv[:, lo:lo + HEAD_DIM]                               # (S, dh)
        kh = qkv[:, HIDDEN + lo:HIDDEN + lo + HEAD_DIM]
        vh = qkv[:, 2 * HIDDEN + lo:2 * HIDDEN + lo + HEAD_DIM]
        s = lax.dot_general(qh.astype(bf16), kh.astype(bf16),
                            (((1,), (1,)), ((), ())),
                            preferred_element_type=f32) * scale     # (S, S)
        s = s + mask_add                                            # broadcast over keys
        s = s - jnp.max(s, axis=-1, keepdims=True)
        p = jnp.exp(s)
        # EUP reciprocal — keeps the divide off the VALU slot.
        # (All-zero attention_mask rows would give uniform weights; not hit here.)
        p = p * pl.reciprocal(jnp.sum(p, axis=-1, keepdims=True), approx=True)
        ctx_heads.append(jnp.dot(p.astype(bf16), vh.astype(bf16),
                                 preferred_element_type=f32))       # (S, dh)
    ctx = jnp.concatenate(ctx_heads, axis=-1)                       # (S, H)

    # ---- output projection + residual + LN1 ----
    attn_out = (jnp.dot(ctx.astype(bf16), w_o_ref[0],
                        preferred_element_type=f32)
                + b_o_ref[0].astype(f32))
    h1 = _layernorm(attn_out + h,
                    ln1_g_ref[0].astype(f32), ln1_b_ref[0].astype(f32))

    # ---- FFN (exact-erf GELU) + residual + LN2 ----
    ff = (jnp.dot(h1.astype(bf16), w_ff1_ref[0],
                  preferred_element_type=f32)
          + b_ff1_ref[0].astype(f32))
    ff = _gelu_exact(ff)
    ff2 = (jnp.dot(ff.astype(bf16), w_ff2_ref[0],
                   preferred_element_type=f32)
           + b_ff2_ref[0].astype(f32))
    h2 = _layernorm(ff2 + h1,
                    ln2_g_ref[0].astype(f32), ln2_b_ref[0].astype(f32))

    out_ref[0] = h2.astype(out_ref.dtype)


def fused_encoder(x_emb, add_mask, params):
    """x_emb: (B,S,H) summed embeddings (pre-LN).  add_mask: (B,1,S) additive."""
    B, S, H = x_emb.shape
    L = NUM_LAYERS
    stk = params["stacked"]

    def shared(shape):
        return pl.BlockSpec(shape, lambda b, l, _n=len(shape): (0,) * _n)

    def per_layer(shape):
        return pl.BlockSpec(shape, lambda b, l, _n=len(shape): (l,) + (0,) * (_n - 1))

    per_batch = pl.BlockSpec((1, S, H), lambda b, l: (b, 0, 0))
    mask_spec = pl.BlockSpec((1, 1, S), lambda b, l: (b, 0, 0))

    in_specs = [
        per_batch, mask_spec,
        shared((1, H)), shared((1, H)),                             # embedding LN
        per_layer((1, H, 3 * H)), per_layer((1, 1, 3 * H)),         # fused QKV
        per_layer((1, H, H)), per_layer((1, 1, H)),                 # output proj
        per_layer((1, 1, H)), per_layer((1, 1, H)),                 # LN1
        per_layer((1, H, FFN)), per_layer((1, 1, FFN)),             # FF1
        per_layer((1, FFN, H)), per_layer((1, 1, H)),               # FF2
        per_layer((1, 1, H)), per_layer((1, 1, H)),                 # LN2
    ]

    return pl.pallas_call(
        _fused_encoder_kernel,
        out_shape=jax.ShapeDtypeStruct((B, S, H), jnp.float32),
        grid=(B, L),
        in_specs=in_specs,
        out_specs=pl.BlockSpec((1, S, H), lambda b, l: (b, 0, 0)),
        compiler_params=pltpu.CompilerParams(
            dimension_semantics=("parallel", "arbitrary")),
    )(x_emb, add_mask,
      params["emb_ln_g"], params["emb_ln_b"],
      stk["w_qkv"], stk["b_qkv"], stk["w_o"], stk["b_o"],
      stk["ln1_g"], stk["ln1_b"], stk["w_ff1"], stk["b_ff1"],
      stk["w_ff2"], stk["b_ff2"], stk["ln2_g"], stk["ln2_b"])


# ------------------------------ parameter init ---------------------------------
def init_params(key):
    keys = iter(jax.random.split(key, 16))

    def nrm(shape, scale=0.02):
        return jax.random.normal(next(keys), shape, jnp.float32) * scale

    params = {
        "word_emb": nrm((VOCAB, HIDDEN)),
        "pos_emb": nrm((MAX_POS, HIDDEN)),
        "type_emb": nrm((2, HIDDEN)),
        "emb_ln_g": jnp.ones((1, HIDDEN), jnp.float32),
        "emb_ln_b": jnp.zeros((1, HIDDEN), jnp.float32),
        # nn.Embedding(num_sentiment_classes, H) default init is N(0, 1)
        "sentiment_emb": jax.random.normal(next(keys), (NUM_SENTIMENT, HIDDEN),
                                           jnp.float32),
        "cls_w": nrm((2 * HIDDEN, NUM_LABELS)),
        "cls_b": jnp.zeros((NUM_LABELS,), jnp.float32),
    }

    L, bf16 = NUM_LAYERS, jnp.bfloat16
    params["stacked"] = {
        # weights in bf16 (MXU-native, halves VMEM/HBM traffic); biases/LN in f32
        "w_qkv": nrm((L, HIDDEN, 3 * HIDDEN)).astype(bf16),
        "b_qkv": jnp.zeros((L, 1, 3 * HIDDEN), jnp.float32),
        "w_o":   nrm((L, HIDDEN, HIDDEN)).astype(bf16),
        "b_o":   jnp.zeros((L, 1, HIDDEN), jnp.float32),
        "ln1_g": jnp.ones((L, 1, HIDDEN), jnp.float32),
        "ln1_b": jnp.zeros((L, 1, HIDDEN), jnp.float32),
        "w_ff1": nrm((L, HIDDEN, FFN)).astype(bf16),
        "b_ff1": jnp.zeros((L, 1, FFN), jnp.float32),
        "w_ff2": nrm((L, FFN, HIDDEN)).astype(bf16),
        "b_ff2": jnp.zeros((L, 1, HIDDEN), jnp.float32),
        "ln2_g": jnp.ones((L, 1, HIDDEN), jnp.float32),
        "ln2_b": jnp.zeros((L, 1, HIDDEN), jnp.float32),
    }
    return params


# ------------------------------ model forward -----------------------------------
def forward(params, input_ids, attention_mask, sentiment, labels=None):
    B, S = input_ids.shape
    # Embeddings (word + position + token-type=0); LayerNorm happens in-kernel.
    we = jnp.take(params["word_emb"], input_ids, axis=0)            # (B, S, H)
    pe = params["pos_emb"][None, :S, :]
    te = params["type_emb"][0][None, None, :]
    x_emb = (we + pe + te).astype(jnp.float32)

    add_mask = ((1.0 - attention_mask.astype(jnp.float32)) * -1e9).reshape(B, 1, S)

    hidden = fused_encoder(x_emb, add_mask, params)                 # (B, S, H)

    cls_tok = hidden[:, 0, :]                                       # last_hidden_state[:, 0, :]
    sent = jnp.take(params["sentiment_emb"], sentiment, axis=0)
    combined = jnp.concatenate([cls_tok, sent], axis=1)             # (B, 2H)
    # dropout(p=0.3) is identity at inference; classifier is a (B,2H)@(2H,4)
    # micro-matmul — plain XLA dot (a pallas dispatch would cost more than the op).
    logits = combined @ params["cls_w"] + params["cls_b"]

    if labels is not None:
        logp = jax.nn.log_softmax(logits, axis=-1)
        loss = -jnp.mean(jnp.take_along_axis(logp, labels[:, None], axis=1))
        return {"loss": loss, "logits": logits}
    return {"logits": logits}


if __name__ == "__main__":
    B, S = 2, 8
    key = jax.random.PRNGKey(0)
    kp, kid, ksent = jax.random.split(key, 3)
    params = init_params(kp)
    input_ids = jax.random.randint(kid, (B, S), 0, VOCAB, dtype=jnp.int32)
    attention_mask = jnp.ones((B, S), dtype=jnp.int32)
    sentiment = jax.random.randint(ksent, (B,), 0, NUM_SENTIMENT, dtype=jnp.int32)

    out = jax.jit(forward)(params, input_ids, attention_mask, sentiment)
    logits = jax.block_until_ready(out["logits"])
    assert logits.shape == (B, NUM_LABELS)
    print("KERNEL_OK")
</pallas_src>

<mosaic_0001>
module attributes {stable_mosaic.version = 11 : i64} {
  func.func @_fused_encoder_kernel(%arg0: i32, %arg1: i32, %arg2: memref<1x8x128xf32, #tpu.memory_space<vmem>>, %arg3: memref<1x1x8xf32, #tpu.memory_space<vmem>>, %arg4: memref<1x128xf32, #tpu.memory_space<vmem>>, %arg5: memref<1x128xf32, #tpu.memory_space<vmem>>, %arg6: memref<1x128x384xbf16, #tpu.memory_space<vmem>>, %arg7: memref<1x1x384xf32, #tpu.memory_space<vmem>>, %arg8: memref<1x128x128xbf16, #tpu.memory_space<vmem>>, %arg9: memref<1x1x128xf32, #tpu.memory_space<vmem>>, %arg10: memref<1x1x128xf32, #tpu.memory_space<vmem>>, %arg11: memref<1x1x128xf32, #tpu.memory_space<vmem>>, %arg12: memref<1x128x512xbf16, #tpu.memory_space<vmem>>, %arg13: memref<1x1x512xf32, #tpu.memory_space<vmem>>, %arg14: memref<1x512x128xbf16, #tpu.memory_space<vmem>>, %arg15: memref<1x1x128xf32, #tpu.memory_space<vmem>>, %arg16: memref<1x1x128xf32, #tpu.memory_space<vmem>>, %arg17: memref<1x1x128xf32, #tpu.memory_space<vmem>>, %arg18: memref<1x8x128xf32, #tpu.memory_space<vmem>>) attributes {dimension_semantics = [#tpu.dimension_semantics<parallel>, #tpu.dimension_semantics<arbitrary>], iteration_bounds = array<i64: 2, 2>, scalar_prefetch = 0 : i64, scratch_operands = 0 : i64, tpu.core_type = #tpu.core_type<tc>, window_params = [{transform_indices = @transform_0, window_bounds = array<i64: 1, 8, 128>}, {transform_indices = @transform_1, window_bounds = array<i64: 1, 1, 8>}, {pipeline_mode = #tpu.pipeline_mode<synchronous>, transform_indices = @transform_2, window_bounds = array<i64: 1, 128>}, {pipeline_mode = #tpu.pipeline_mode<synchronous>, transform_indices = @transform_3, window_bounds = array<i64: 1, 128>}, {transform_indices = @transform_4, window_bounds = array<i64: 1, 128, 384>}, {transform_indices = @transform_5, window_bounds = array<i64: 1, 1, 384>}, {transform_indices = @transform_6, window_bounds = array<i64: 1, 128, 128>}, {transform_indices = @transform_7, window_bounds = array<i64: 1, 1, 128>}, {transform_indices = @transform_8, window_bounds = array<i64: 1, 1, 128>}, {transform_indices = @transform_9, window_bounds = array<i64: 1, 1, 128>}, {transform_indices = @transform_10, window_bounds = array<i64: 1, 128, 512>}, {transform_indices = @transform_11, window_bounds = array<i64: 1, 1, 512>}, {transform_indices = @transform_12, window_bounds = array<i64: 1, 512, 128>}, {transform_indices = @transform_13, window_bounds = array<i64: 1, 1, 128>}, {transform_indices = @transform_14, window_bounds = array<i64: 1, 1, 128>}, {transform_indices = @transform_15, window_bounds = array<i64: 1, 1, 128>}, {transform_indices = @transform_16, window_bounds = array<i64: 1, 8, 128>}]} {
    %c0_i32 = arith.constant 0 : i32
    %0 = arith.cmpi eq, %arg1, %c0_i32 : i32
    %1 = arith.extui %0 : i1 to i32
    %c0_i32_0 = arith.constant 0 : i32
    %2 = arith.cmpi ne, %1, %c0_i32_0 : i32
    scf.if %2 {
      %c0_93 = arith.constant 0 : index
      %c0_94 = arith.constant 0 : index
      %c0_95 = arith.constant 0 : index
      %229 = vector.load %arg2[%c0_93, %c0_94, %c0_95] : memref<1x8x128xf32, #tpu.memory_space<vmem>>, vector<1x8x128xf32>
      %230 = vector.shape_cast %229 : vector<1x8x128xf32> to vector<8x128xf32>
      %c0_96 = arith.constant 0 : index
      %c0_97 = arith.constant 0 : index
      %231 = vector.load %arg4[%c0_96, %c0_97] : memref<1x128xf32, #tpu.memory_space<vmem>>, vector<1x128xf32>
      %c0_98 = arith.constant 0 : index
      %c0_99 = arith.constant 0 : index
      %232 = vector.load %arg5[%c0_98, %c0_99] : memref<1x128xf32, #tpu.memory_space<vmem>>, vector<1x128xf32>
      %cst_100 = arith.constant dense<0.000000e+00> : vector<8xf32>
      %233 = vector.multi_reduction <add>, %230, %cst_100 [1] : vector<8x128xf32> to vector<8xf32>
      %234 = vector.shape_cast %233 : vector<8xf32> to vector<8x1xf32>
      %cst_101 = arith.constant 1.280000e+02 : f32
      %235 = vector.broadcast %cst_101 : f32 to vector<8x1xf32>
      %236 = arith.divf %234, %235 : vector<8x1xf32>
      %237 = vector.broadcast %236 : vector<8x1xf32> to vector<8x128xf32>
      %238 = arith.subf %230, %237 : vector<8x128xf32>
      %239 = arith.mulf %238, %238 : vector<8x128xf32>
      %cst_102 = arith.constant dense<0.000000e+00> : vector<8xf32>
      %240 = vector.multi_reduction <add>, %239, %cst_102 [1] : vector<8x128xf32> to vector<8xf32>
      %241 = vector.shape_cast %240 : vector<8xf32> to vector<8x1xf32>
      %cst_103 = arith.constant 1.280000e+02 : f32
      %242 = vector.broadcast %cst_103 : f32 to vector<8x1xf32>
      %243 = arith.divf %241, %242 : vector<8x1xf32>
      %244 = vector.broadcast %236 : vector<8x1xf32> to vector<8x128xf32>
      %245 = arith.subf %230, %244 : vector<8x128xf32>
      %cst_104 = arith.constant 9.99999996E-13 : f32
      %246 = vector.broadcast %cst_104 : f32 to vector<8x1xf32>
      %247 = arith.addf %243, %246 : vector<8x1xf32>
      %248 = math.rsqrt %247 : vector<8x1xf32>
      %249 = vector.broadcast %248 : vector<8x1xf32> to vector<8x128xf32>
      %250 = arith.mulf %245, %249 : vector<8x128xf32>
      %251 = vector.broadcast %231 : vector<1x128xf32> to vector<8x128xf32>
      %252 = arith.mulf %250, %251 : vector<8x128xf32>
      %253 = vector.broadcast %232 : vector<1x128xf32> to vector<8x128xf32>
      %254 = arith.addf %252, %253 : vector<8x128xf32>
      %c0_105 = arith.constant 0 : index
      %c0_106 = arith.constant 0 : index
      %c0_107 = arith.constant 0 : index
      %255 = vector.load %arg18[%c0_105, %c0_106, %c0_107] : memref<1x8x128xf32, #tpu.memory_space<vmem>>, vector<1x8x128xf32>
      %256 = vector.shape_cast %255 : vector<1x8x128xf32> to vector<8x128xf32>
      %257 = vector.shape_cast %254 : vector<8x128xf32> to vector<1x8x128xf32>
      tpu.vector_store %arg18[%c0_105, %c0_106, %c0_107], %257 {strides = array<i32>} : memref<1x8x128xf32, #tpu.memory_space<vmem>>, vector<1x8x128xf32>,
    } else {
    }
    %c0 = arith.constant 0 : index
    %c0_1 = arith.constant 0 : index
    %c0_2 = arith.constant 0 : index
    %3 = vector.load %arg18[%c0, %c0_1, %c0_2] : memref<1x8x128xf32, #tpu.memory_space<vmem>>, vector<1x8x128xf32>
    %4 = vector.shape_cast %3 : vector<1x8x128xf32> to vector<8x128xf32>
    %c0_3 = arith.constant 0 : index
    %c0_4 = arith.constant 0 : index
    %c0_5 = arith.constant 0 : index
    %5 = vector.load %arg3[%c0_3, %c0_4, %c0_5] : memref<1x1x8xf32, #tpu.memory_space<vmem>>, vector<1x1x8xf32>
    %6 = vector.shape_cast %5 : vector<1x1x8xf32> to vector<1x8xf32>
    %7 = arith.truncf %4 : vector<8x128xf32> to vector<8x128xbf16>
    %c0_6 = arith.constant 0 : index
    %c0_7 = arith.constant 0 : index
    %c0_8 = arith.constant 0 : index
    %8 = vector.load %arg6[%c0_6, %c0_7, %c0_8] : memref<1x128x384xbf16, #tpu.memory_space<vmem>>, vector<1x128x384xbf16>
    %9 = vector.shape_cast %8 : vector<1x128x384xbf16> to vector<128x384xbf16>
    %cst = arith.constant dense<0.000000e+00> : vector<8x384xf32>
    %10 = tpu.matmul %7, %9, %cst {dimension_numbers = #tpu.dot_dimension_numbers<[1], [0], [0], [1], [0, 0, 1, 1], [], []>} : vector<8x128xbf16>, vector<128x384xbf16>, vector<8x384xf32> -> vector<8x384xf32>
    %c0_9 = arith.constant 0 : index
    %c0_10 = arith.constant 0 : index
    %c0_11 = arith.constant 0 : index
    %11 = vector.load %arg7[%c0_9, %c0_10, %c0_11] : memref<1x1x384xf32, #tpu.memory_space<vmem>>, vector<1x1x384xf32>
    %12 = vector.shape_cast %11 : vector<1x1x384xf32> to vector<1x384xf32>
    %13 = vector.broadcast %12 : vector<1x384xf32> to vector<8x384xf32>
    %14 = arith.addf %10, %13 : vector<8x384xf32>
    %15 = vector.extract_strided_slice %14 {offsets = [0, 0], sizes = [8, 32], strides = [1, 1]} : vector<8x384xf32> to vector<8x32xf32>
    %16 = vector.extract_strided_slice %14 {offsets = [0, 128], sizes = [8, 32], strides = [1, 1]} : vector<8x384xf32> to vector<8x32xf32>
    %17 = vector.extract_strided_slice %14 {offsets = [0, 256], sizes = [8, 32], strides = [1, 1]} : vector<8x384xf32> to vector<8x32xf32>
    %18 = arith.truncf %15 : vector<8x32xf32> to vector<8x32xbf16>
    %19 = arith.truncf %16 : vector<8x32xf32> to vector<8x32xbf16>
    %cst_12 = arith.constant dense<0.000000e+00> : vector<8x8xf32>
    %20 = tpu.matmul %18, %19, %cst_12 {dimension_numbers = #tpu.dot_dimension_numbers<[1], [1], [0], [0], [0, 0, 1, 0], [], []>} : vector<8x32xbf16>, vector<8x32xbf16>, vector<8x8xf32> -> vector<8x8xf32>
    %cst_13 = arith.constant 0.176776692 : f32
    %21 = vector.broadcast %cst_13 : f32 to vector<8x8xf32>
    %22 = arith.mulf %20, %21 : vector<8x8xf32>
    %23 = vector.broadcast %6 : vector<1x8xf32> to vector<8x8xf32>
    %24 = arith.addf %22, %23 : vector<8x8xf32>
    %cst_14 = arith.constant dense<0xFF800000> : vector<8xf32>
    %25 = vector.multi_reduction <maximumf>, %24, %cst_14 [1] : vector<8x8xf32> to vector<8xf32>
    %26 = vector.shape_cast %25 : vector<8xf32> to vector<8x1xf32>
    %27 = vector.broadcast %26 : vector<8x1xf32> to vector<8x8xf32>
    %28 = arith.subf %24, %27 : vector<8x8xf32>
    %29 = math.exp %28 : vector<8x8xf32>
    %cst_15 = arith.constant dense<0.000000e+00> : vector<8xf32>
    %30 = vector.multi_reduction <add>, %29, %cst_15 [1] : vector<8x8xf32> to vector<8xf32>
    %31 = vector.shape_cast %30 : vector<8xf32> to vector<8x1xf32>
    %32 = tpu.reciprocal %31 {approx = true} : vector<8x1xf32> -> vector<8x1xf32>
    %33 = vector.broadcast %32 : vector<8x1xf32> to vector<8x8xf32>
    %34 = arith.mulf %29, %33 : vector<8x8xf32>
    %35 = arith.truncf %34 : vector<8x8xf32> to vector<8x8xbf16>
    %36 = arith.truncf %17 : vector<8x32xf32> to vector<8x32xbf16>
    %cst_16 = arith.constant dense<0.000000e+00> : vector<8x32xf32>
    %37 = tpu.matmul %35, %36, %cst_16 {dimension_numbers = #tpu.dot_dimension_numbers<[1], [0], [0], [1], [0, 0, 1, 1], [], []>} : vector<8x8xbf16>, vector<8x32xbf16>, vector<8x32xf32> -> vector<8x32xf32>
    %38 = vector.extract_strided_slice %14 {offsets = [0, 32], sizes = [8, 32], strides = [1, 1]} : vector<8x384xf32> to vector<8x32xf32>
    %39 = vector.extract_strided_slice %14 {offsets = [0, 160], sizes = [8, 32], strides = [1, 1]} : vector<8x384xf32> to vector<8x32xf32>
    %40 = vector.extract_strided_slice %14 {offsets = [0, 288], sizes = [8, 32], strides = [1, 1]} : vector<8x384xf32> to vector<8x32xf32>
    %41 = arith.truncf %38 : vector<8x32xf32> to vector<8x32xbf16>
    %42 = arith.truncf %39 : vector<8x32xf32> to vector<8x32xbf16>
    %cst_17 = arith.constant dense<0.000000e+00> : vector<8x8xf32>
    %43 = tpu.matmul %41, %42, %cst_17 {dimension_numbers = #tpu.dot_dimension_numbers<[1], [1], [0], [0], [0, 0, 1, 0], [], []>} : vector<8x32xbf16>, vector<8x32xbf16>, vector<8x8xf32> -> vector<8x8xf32>
    %cst_18 = arith.constant 0.176776692 : f32
    %44 = vector.broadcast %cst_18 : f32 to vector<8x8xf32>
    %45 = arith.mulf %43, %44 : vector<8x8xf32>
    %46 = vector.broadcast %6 : vector<1x8xf32> to vector<8x8xf32>
    %47 = arith.addf %45, %46 : vector<8x8xf32>
    %cst_19 = arith.constant dense<0xFF800000> : vector<8xf32>
    %48 = vector.multi_reduction <maximumf>, %47, %cst_19 [1] : vector<8x8xf32> to vector<8xf32>
    %49 = vector.shape_cast %48 : vector<8xf32> to vector<8x1xf32>
    %50 = vector.broadcast %49 : vector<8x1xf32> to vector<8x8xf32>
    %51 = arith.subf %47, %50 : vector<8x8xf32>
    %52 = math.exp %51 : vector<8x8xf32>
    %cst_20 = arith.constant dense<0.000000e+00> : vector<8xf32>
    %53 = vector.multi_reduction <add>, %52, %cst_20 [1] : vector<8x8xf32> to vector<8xf32>
    %54 = vector.shape_cast %53 : vector<8xf32> to vector<8x1xf32>
    %55 = tpu.reciprocal %54 {approx = true} : vector<8x1xf32> -> vector<8x1xf32>
    %56 = vector.broadcast %55 : vector<8x1xf32> to vector<8x8xf32>
    %57 = arith.mulf %52, %56 : vector<8x8xf32>
    %58 = arith.truncf %57 : vector<8x8xf32> to vector<8x8xbf16>
    %59 = arith.truncf %40 : vector<8x32xf32> to vector<8x32xbf16>
    %cst_21 = arith.constant dense<0.000000e+00> : vector<8x32xf32>
    %60 = tpu.matmul %58, %59, %cst_21 {dimension_numbers = #tpu.dot_dimension_numbers<[1], [0], [0], [1], [0, 0, 1, 1], [], []>} : vector<8x8xbf16>, vector<8x32xbf16>, vector<8x32xf32> -> vector<8x32xf32>
    %61 = vector.extract_strided_slice %14 {offsets = [0, 64], sizes = [8, 32], strides = [1, 1]} : vector<8x384xf32> to vector<8x32xf32>
    %62 = vector.extract_strided_slice %14 {offsets = [0, 192], sizes = [8, 32], strides = [1, 1]} : vector<8x384xf32> to vector<8x32xf32>
    %63 = vector.extract_strided_slice %14 {offsets = [0, 320], sizes = [8, 32], strides = [1, 1]} : vector<8x384xf32> to vector<8x32xf32>
    %64 = arith.truncf %61 : vector<8x32xf32> to vector<8x32xbf16>
    %65 = arith.truncf %62 : vector<8x32xf32> to vector<8x32xbf16>
    %cst_22 = arith.constant dense<0.000000e+00> : vector<8x8xf32>
    %66 = tpu.matmul %64, %65, %cst_22 {dimension_numbers = #tpu.dot_dimension_numbers<[1], [1], [0], [0], [0, 0, 1, 0], [], []>} : vector<8x32xbf16>, vector<8x32xbf16>, vector<8x8xf32> -> vector<8x8xf32>
    %cst_23 = arith.constant 0.176776692 : f32
    %67 = vector.broadcast %cst_23 : f32 to vector<8x8xf32>
    %68 = arith.mulf %66, %67 : vector<8x8xf32>
    %69 = vector.broadcast %6 : vector<1x8xf32> to vector<8x8xf32>
    %70 = arith.addf %68, %69 : vector<8x8xf32>
    %cst_24 = arith.constant dense<0xFF800000> : vector<8xf32>
    %71 = vector.multi_reduction <maximumf>, %70, %cst_24 [1] : vector<8x8xf32> to vector<8xf32>
    %72 = vector.shape_cast %71 : vector<8xf32> to vector<8x1xf32>
    %73 = vector.broadcast %72 : vector<8x1xf32> to vector<8x8xf32>
    %74 = arith.subf %70, %73 : vector<8x8xf32>
    %75 = math.exp %74 : vector<8x8xf32>
    %cst_25 = arith.constant dense<0.000000e+00> : vector<8xf32>
    %76 = vector.multi_reduction <add>, %75, %cst_25 [1] : vector<8x8xf32> to vector<8xf32>
    %77 = vector.shape_cast %76 : vector<8xf32> to vector<8x1xf32>
    %78 = tpu.reciprocal %77 {approx = true} : vector<8x1xf32> -> vector<8x1xf32>
    %79 = vector.broadcast %78 : vector<8x1xf32> to vector<8x8xf32>
    %80 = arith.mulf %75, %79 : vector<8x8xf32>
    %81 = arith.truncf %80 : vector<8x8xf32> to vector<8x8xbf16>
    %82 = arith.truncf %63 : vector<8x32xf32> to vector<8x32xbf16>
    %cst_26 = arith.constant dense<0.000000e+00> : vector<8x32xf32>
    %83 = tpu.matmul %81, %82, %cst_26 {dimension_numbers = #tpu.dot_dimension_numbers<[1], [0], [0], [1], [0, 0, 1, 1], [], []>} : vector<8x8xbf16>, vector<8x32xbf16>, vector<8x32xf32> -> vector<8x32xf32>
    %84 = vector.extract_strided_slice %14 {offsets = [0, 96], sizes = [8, 32], strides = [1, 1]} : vector<8x384xf32> to vector<8x32xf32>
    %85 = vector.extract_strided_slice %14 {offsets = [0, 224], sizes = [8, 32], strides = [1, 1]} : vector<8x384xf32> to vector<8x32xf32>
    %86 = vector.extract_strided_slice %14 {offsets = [0, 352], sizes = [8, 32], strides = [1, 1]} : vector<8x384xf32> to vector<8x32xf32>
    %87 = arith.truncf %84 : vector<8x32xf32> to vector<8x32xbf16>
    %88 = arith.truncf %85 : vector<8x32xf32> to vector<8x32xbf16>
    %cst_27 = arith.constant dense<0.000000e+00> : vector<8x8xf32>
    %89 = tpu.matmul %87, %88, %cst_27 {dimension_numbers = #tpu.dot_dimension_numbers<[1], [1], [0], [0], [0, 0, 1, 0], [], []>} : vector<8x32xbf16>, vector<8x32xbf16>, vector<8x8xf32> -> vector<8x8xf32>
    %cst_28 = arith.constant 0.176776692 : f32
    %90 = vector.broadcast %cst_28 : f32 to vector<8x8xf32>
    %91 = arith.mulf %89, %90 : vector<8x8xf32>
    %92 = vector.broadcast %6 : vector<1x8xf32> to vector<8x8xf32>
    %93 = arith.addf %91, %92 : vector<8x8xf32>
    %cst_29 = arith.constant dense<0xFF800000> : vector<8xf32>
    %94 = vector.multi_reduction <maximumf>, %93, %cst_29 [1] : vector<8x8xf32> to vector<8xf32>
    %95 = vector.shape_cast %94 : vector<8xf32> to vector<8x1xf32>
    %96 = vector.broadcast %95 : vector<8x1xf32> to vector<8x8xf32>
    %97 = arith.subf %93, %96 : vector<8x8xf32>
    %98 = math.exp %97 : vector<8x8xf32>
    %cst_30 = arith.constant dense<0.000000e+00> : vector<8xf32>
    %99 = vector.multi_reduction <add>, %98, %cst_30 [1] : vector<8x8xf32> to vector<8xf32>
    %100 = vector.shape_cast %99 : vector<8xf32> to vector<8x1xf32>
    %101 = tpu.reciprocal %100 {approx = true} : vector<8x1xf32> -> vector<8x1xf32>
    %102 = vector.broadcast %101 : vector<8x1xf32> to vector<8x8xf32>
    %103 = arith.mulf %98, %102 : vector<8x8xf32>
    %104 = arith.truncf %103 : vector<8x8xf32> to vector<8x8xbf16>
    %105 = arith.truncf %86 : vector<8x32xf32> to vector<8x32xbf16>
    %cst_31 = arith.constant dense<0.000000e+00> : vector<8x32xf32>
    %106 = tpu.matmul %104, %105, %cst_31 {dimension_numbers = #tpu.dot_dimension_numbers<[1], [0], [0], [1], [0, 0, 1, 1], [], []>} : vector<8x8xbf16>, vector<8x32xbf16>, vector<8x32xf32> -> vector<8x32xf32>
    %107 = tpu.concatenate %37, %60, %83, %106 in 1 : vector<8x32xf32>, vector<8x32xf32>, vector<8x32xf32>, vector<8x32xf32> -> vector<8x128xf32>
    %108 = arith.truncf %107 : vector<8x128xf32> to vector<8x128xbf16>
    %c0_32 = arith.constant 0 : index
    %c0_33 = arith.constant 0 : index
    %c0_34 = arith.constant 0 : index
    %109 = vector.load %arg8[%c0_32, %c0_33, %c0_34] : memref<1x128x128xbf16, #tpu.memory_space<vmem>>, vector<1x128x128xbf16>
    %110 = vector.shape_cast %109 : vector<1x128x128xbf16> to vector<128x128xbf16>
    %cst_35 = arith.constant dense<0.000000e+00> : vector<8x128xf32>
    %111 = tpu.matmul %108, %110, %cst_35 {dimension_numbers = #tpu.dot_dimension_numbers<[1], [0], [0], [1], [0, 0, 1, 1], [], []>} : vector<8x128xbf16>, vector<128x128xbf16>, vector<8x128xf32> -> vector<8x128xf32>
    %c0_36 = arith.constant 0 : index
    %c0_37 = arith.constant 0 : index
    %c0_38 = arith.constant 0 : index
    %112 = vector.load %arg9[%c0_36, %c0_37, %c0_38] : memref<1x1x128xf32, #tpu.memory_space<vmem>>, vector<1x1x128xf32>
    %113 = vector.shape_cast %112 : vector<1x1x128xf32> to vector<1x128xf32>
    %114 = vector.broadcast %113 : vector<1x128xf32> to vector<8x128xf32>
    %115 = arith.addf %111, %114 : vector<8x128xf32>
    %116 = arith.addf %115, %4 : vector<8x128xf32>
    %c0_39 = arith.constant 0 : index
    %c0_40 = arith.constant 0 : index
    %c0_41 = arith.constant 0 : index
    %117 = vector.load %arg10[%c0_39, %c0_40, %c0_41] : memref<1x1x128xf32, #tpu.memory_space<vmem>>, vector<1x1x128xf32>
    %118 = vector.shape_cast %117 : vector<1x1x128xf32> to vector<1x128xf32>
    %c0_42 = arith.constant 0 : index
    %c0_43 = arith.constant 0 : index
    %c0_44 = arith.constant 0 : index
    %119 = vector.load %arg11[%c0_42, %c0_43, %c0_44] : memref<1x1x128xf32, #tpu.memory_space<vmem>>, vector<1x1x128xf32>
    %120 = vector.shape_cast %119 : vector<1x1x128xf32> to vector<1x128xf32>
    %cst_45 = arith.constant dense<0.000000e+00> : vector<8xf32>
    %121 = vector.multi_reduction <add>, %116, %cst_45 [1] : vector<8x128xf32> to vector<8xf32>
    %122 = vector.shape_cast %121 : vector<8xf32> to vector<8x1xf32>
    %cst_46 = arith.constant 1.280000e+02 : f32
    %123 = vector.broadcast %cst_46 : f32 to vector<8x1xf32>
    %124 = arith.divf %122, %123 : vector<8x1xf32>
    %125 = vector.broadcast %124 : vector<8x1xf32> to vector<8x128xf32>
    %126 = arith.subf %116, %125 : vector<8x128xf32>
    %127 = arith.mulf %126, %126 : vector<8x128xf32>
    %cst_47 = arith.constant dense<0.000000e+00> : vector<8xf32>
    %128 = vector.multi_reduction <add>, %127, %cst_47 [1] : vector<8x128xf32> to vector<8xf32>
    %129 = vector.shape_cast %128 : vector<8xf32> to vector<8x1xf32>
    %cst_48 = arith.constant 1.280000e+02 : f32
    %130 = vector.broadcast %cst_48 : f32 to vector<8x1xf32>
    %131 = arith.divf %129, %130 : vector<8x1xf32>
    %132 = vector.broadcast %124 : vector<8x1xf32> to vector<8x128xf32>
    %133 = arith.subf %116, %132 : vector<8x128xf32>
    %cst_49 = arith.constant 9.99999996E-13 : f32
    %134 = vector.broadcast %cst_49 : f32 to vector<8x1xf32>
    %135 = arith.addf %131, %134 : vector<8x1xf32>
    %136 = math.rsqrt %135 : vector<8x1xf32>
    %137 = vector.broadcast %136 : vector<8x1xf32> to vector<8x128xf32>
    %138 = arith.mulf %133, %137 : vector<8x128xf32>
    %139 = vector.broadcast %118 : vector<1x128xf32> to vector<8x128xf32>
    %140 = arith.mulf %138, %139 : vector<8x128xf32>
    %141 = vector.broadcast %120 : vector<1x128xf32> to vector<8x128xf32>
    %142 = arith.addf %140, %141 : vector<8x128xf32>
    %143 = arith.truncf %142 : vector<8x128xf32> to vector<8x128xbf16>
    %c0_50 = arith.constant 0 : index
    %c0_51 = arith.constant 0 : index
    %c0_52 = arith.constant 0 : index
    %144 = vector.load %arg12[%c0_50, %c0_51, %c0_52] : memref<1x128x512xbf16, #tpu.memory_space<vmem>>, vector<1x128x512xbf16>
    %145 = vector.shape_cast %144 : vector<1x128x512xbf16> to vector<128x512xbf16>
    %cst_53 = arith.constant dense<0.000000e+00> : vector<8x512xf32>
    %146 = tpu.matmul %143, %145, %cst_53 {dimension_numbers = #tpu.dot_dimension_numbers<[1], [0], [0], [1], [0, 0, 1, 1], [], []>} : vector<8x128xbf16>, vector<128x512xbf16>, vector<8x512xf32> -> vector<8x512xf32>
    %c0_54 = arith.constant 0 : index
    %c0_55 = arith.constant 0 : index
    %c0_56 = arith.constant 0 : index
    %147 = vector.load %arg13[%c0_54, %c0_55, %c0_56] : memref<1x1x512xf32, #tpu.memory_space<vmem>>, vector<1x1x512xf32>
    %148 = vector.shape_cast %147 : vector<1x1x512xf32> to vector<1x512xf32>
    %149 = vector.broadcast %148 : vector<1x512xf32> to vector<8x512xf32>
    %150 = arith.addf %146, %149 : vector<8x512xf32>
    %cst_57 = arith.constant 5.000000e-01 : f32
    %151 = vector.broadcast %cst_57 : f32 to vector<8x512xf32>
    %152 = arith.mulf %151, %150 : vector<8x512xf32>
    %cst_58 = arith.constant 0.707106769 : f32
    %153 = vector.broadcast %cst_58 : f32 to vector<8x512xf32>
    %154 = arith.mulf %150, %153 : vector<8x512xf32>
    %155 = math.absf %154 : vector<8x512xf32>
    %cst_59 = arith.constant 0.327591091 : f32
    %156 = vector.broadcast %cst_59 : f32 to vector<8x512xf32>
    %157 = arith.mulf %156, %155 : vector<8x512xf32>
    %cst_60 = arith.constant 1.000000e+00 : f32
    %158 = vector.broadcast %cst_60 : f32 to vector<8x512xf32>
    %159 = arith.addf %158, %157 : vector<8x512xf32>
    %cst_61 = arith.constant 1.000000e+00 : f32
    %160 = vector.broadcast %cst_61 : f32 to vector<8x512xf32>
    %161 = arith.divf %160, %159 : vector<8x512xf32>
    %cst_62 = arith.constant 1.06140542 : f32
    %162 = vector.broadcast %cst_62 : f32 to vector<8x512xf32>
    %163 = arith.mulf %162, %161 : vector<8x512xf32>
    %cst_63 = arith.constant -1.45315206 : f32
    %164 = vector.broadcast %cst_63 : f32 to vector<8x512xf32>
    %165 = arith.addf %163, %164 : vector<8x512xf32>
    %166 = arith.mulf %165, %161 : vector<8x512xf32>
    %cst_64 = arith.constant 1.42141378 : f32
    %167 = vector.broadcast %cst_64 : f32 to vector<8x512xf32>
    %168 = arith.addf %166, %167 : vector<8x512xf32>
    %169 = arith.mulf %168, %161 : vector<8x512xf32>
    %cst_65 = arith.constant -0.284496725 : f32
    %170 = vector.broadcast %cst_65 : f32 to vector<8x512xf32>
    %171 = arith.addf %169, %170 : vector<8x512xf32>
    %172 = arith.mulf %171, %161 : vector<8x512xf32>
    %cst_66 = arith.constant 0.254829586 : f32
    %173 = vector.broadcast %cst_66 : f32 to vector<8x512xf32>
    %174 = arith.addf %172, %173 : vector<8x512xf32>
    %175 = arith.mulf %174, %161 : vector<8x512xf32>
    %cst_67 = arith.constant 0.000000e+00 : f32
    %176 = vector.broadcast %cst_67 : f32 to vector<8x512xf32>
    %177 = arith.subf %176, %155 : vector<8x512xf32>
    %178 = arith.mulf %177, %155 : vector<8x512xf32>
    %179 = math.exp %178 : vector<8x512xf32>
    %180 = arith.mulf %175, %179 : vector<8x512xf32>
    %cst_68 = arith.constant 1.000000e+00 : f32
    %181 = vector.broadcast %cst_68 : f32 to vector<8x512xf32>
    %182 = arith.subf %181, %180 : vector<8x512xf32>
    %cst_69 = arith.constant 0.000000e+00 : f32
    %183 = vector.broadcast %cst_69 : f32 to vector<8x512xf32>
    %184 = arith.cmpf olt, %154, %183 : vector<8x512xf32>
    %cst_70 = arith.constant 0.000000e+00 : f32
    %185 = vector.broadcast %cst_70 : f32 to vector<8x512xf32>
    %186 = arith.subf %185, %182 : vector<8x512xf32>
    %187 = arith.select %184, %186, %182 : vector<8x512xi1>, vector<8x512xf32>
    %cst_71 = arith.constant 1.000000e+00 : f32
    %188 = vector.broadcast %cst_71 : f32 to vector<8x512xf32>
    %189 = arith.addf %188, %187 : vector<8x512xf32>
    %190 = arith.mulf %152, %189 : vector<8x512xf32>
    %191 = arith.truncf %190 : vector<8x512xf32> to vector<8x512xbf16>
    %c0_72 = arith.constant 0 : index
    %c0_73 = arith.constant 0 : index
    %c0_74 = arith.constant 0 : index
    %192 = vector.load %arg14[%c0_72, %c0_73, %c0_74] : memref<1x512x128xbf16, #tpu.memory_space<vmem>>, vector<1x512x128xbf16>
    %193 = vector.shape_cast %192 : vector<1x512x128xbf16> to vector<512x128xbf16>
    %cst_75 = arith.constant dense<0.000000e+00> : vector<8x128xf32>
    %194 = tpu.matmul %191, %193, %cst_75 {dimension_numbers = #tpu.dot_dimension_numbers<[1], [0], [0], [1], [0, 0, 1, 1], [], []>} : vector<8x512xbf16>, vector<512x128xbf16>, vector<8x128xf32> -> vector<8x128xf32>
    %c0_76 = arith.constant 0 : index
    %c0_77 = arith.constant 0 : index
    %c0_78 = arith.constant 0 : index
    %195 = vector.load %arg15[%c0_76, %c0_77, %c0_78] : memref<1x1x128xf32, #tpu.memory_space<vmem>>, vector<1x1x128xf32>
    %196 = vector.shape_cast %195 : vector<1x1x128xf32> to vector<1x128xf32>
    %197 = vector.broadcast %196 : vector<1x128xf32> to vector<8x128xf32>
    %198 = arith.addf %194, %197 : vector<8x128xf32>
    %199 = arith.addf %198, %142 : vector<8x128xf32>
    %c0_79 = arith.constant 0 : index
    %c0_80 = arith.constant 0 : index
    %c0_81 = arith.constant 0 : index
    %200 = vector.load %arg16[%c0_79, %c0_80, %c0_81] : memref<1x1x128xf32, #tpu.memory_space<vmem>>, vector<1x1x128xf32>
    %201 = vector.shape_cast %200 : vector<1x1x128xf32> to vector<1x128xf32>
    %c0_82 = arith.constant 0 : index
    %c0_83 = arith.constant 0 : index
    %c0_84 = arith.constant 0 : index
    %202 = vector.load %arg17[%c0_82, %c0_83, %c0_84] : memref<1x1x128xf32, #tpu.memory_space<vmem>>, vector<1x1x128xf32>
    %203 = vector.shape_cast %202 : vector<1x1x128xf32> to vector<1x128xf32>
    %cst_85 = arith.constant dense<0.000000e+00> : vector<8xf32>
    %204 = vector.multi_reduction <add>, %199, %cst_85 [1] : vector<8x128xf32> to vector<8xf32>
    %205 = vector.shape_cast %204 : vector<8xf32> to vector<8x1xf32>
    %cst_86 = arith.constant 1.280000e+02 : f32
    %206 = vector.broadcast %cst_86 : f32 to vector<8x1xf32>
    %207 = arith.divf %205, %206 : vector<8x1xf32>
    %208 = vector.broadcast %207 : vector<8x1xf32> to vector<8x128xf32>
    %209 = arith.subf %199, %208 : vector<8x128xf32>
    %210 = arith.mulf %209, %209 : vector<8x128xf32>
    %cst_87 = arith.constant dense<0.000000e+00> : vector<8xf32>
    %211 = vector.multi_reduction <add>, %210, %cst_87 [1] : vector<8x128xf32> to vector<8xf32>
    %212 = vector.shape_cast %211 : vector<8xf32> to vector<8x1xf32>
    %cst_88 = arith.constant 1.280000e+02 : f32
    %213 = vector.broadcast %cst_88 : f32 to vector<8x1xf32>
    %214 = arith.divf %212, %213 : vector<8x1xf32>
    %215 = vector.broadcast %207 : vector<8x1xf32> to vector<8x128xf32>
    %216 = arith.subf %199, %215 : vector<8x128xf32>
    %cst_89 = arith.constant 9.99999996E-13 : f32
    %217 = vector.broadcast %cst_89 : f32 to vector<8x1xf32>
    %218 = arith.addf %214, %217 : vector<8x1xf32>
    %219 = math.rsqrt %218 : vector<8x1xf32>
    %220 = vector.broadcast %219 : vector<8x1xf32> to vector<8x128xf32>
    %221 = arith.mulf %216, %220 : vector<8x128xf32>
    %222 = vector.broadcast %201 : vector<1x128xf32> to vector<8x128xf32>
    %223 = arith.mulf %221, %222 : vector<8x128xf32>
    %224 = vector.broadcast %203 : vector<1x128xf32> to vector<8x128xf32>
    %225 = arith.addf %223, %224 : vector<8x128xf32>
    %c0_90 = arith.constant 0 : index
    %c0_91 = arith.constant 0 : index
    %c0_92 = arith.constant 0 : index
    %226 = vector.load %arg18[%c0_90, %c0_91, %c0_92] : memref<1x8x128xf32, #tpu.memory_space<vmem>>, vector<1x8x128xf32>
    %227 = vector.shape_cast %226 : vector<1x8x128xf32> to vector<8x128xf32>
    %228 = vector.shape_cast %225 : vector<8x128xf32> to vector<1x8x128xf32>
    tpu.vector_store %arg18[%c0_90, %c0_91, %c0_92], %228 {strides = array<i32>} : memref<1x8x128xf32, #tpu.memory_space<vmem>>, vector<1x8x128xf32>,
    return
  }
  func.func @transform_0(%arg0: i32, %arg1: i32) -> (i32, i32, i32) {
    %c0_i32 = arith.constant 0 : i32
    %c0_i32_0 = arith.constant 0 : i32
    %c0_i32_1 = arith.constant 0 : i32
    return %arg0, %c0_i32, %c0_i32_0 : i32, i32, i32
  }
  func.func @transform_1(%arg0: i32, %arg1: i32) -> (i32, i32, i32) {
    %c0_i32 = arith.constant 0 : i32
    %c0_i32_0 = arith.constant 0 : i32
    %c0_i32_1 = arith.constant 0 : i32
    return %arg0, %c0_i32, %c0_i32_0 : i32, i32, i32
  }
  func.func @transform_2(%arg0: i32, %arg1: i32) -> (i32, i32) {
    %c0_i32 = arith.constant 0 : i32
    %c0_i32_0 = arith.constant 0 : i32
    %c0_i32_1 = arith.constant 0 : i32
    return %c0_i32, %c0_i32_0 : i32, i32
  }
  func.func @transform_3(%arg0: i32, %arg1: i32) -> (i32, i32) {
    %c0_i32 = arith.constant 0 : i32
    %c0_i32_0 = arith.constant 0 : i32
    %c0_i32_1 = arith.constant 0 : i32
    return %c0_i32, %c0_i32_0 : i32, i32
  }
  func.func @transform_4(%arg0: i32, %arg1: i32) -> (i32, i32, i32) {
    %c0_i32 = arith.constant 0 : i32
    %c0_i32_0 = arith.constant 0 : i32
    %c0_i32_1 = arith.constant 0 : i32
    return %arg1, %c0_i32, %c0_i32_0 : i32, i32, i32
  }
  func.func @transform_5(%arg0: i32, %arg1: i32) -> (i32, i32, i32) {
    %c0_i32 = arith.constant 0 : i32
    %c0_i32_0 = arith.constant 0 : i32
    %c0_i32_1 = arith.constant 0 : i32
    return %arg1, %c0_i32, %c0_i32_0 : i32, i32, i32
  }
  func.func @transform_6(%arg0: i32, %arg1: i32) -> (i32, i32, i32) {
    %c0_i32 = arith.constant 0 : i32
    %c0_i32_0 = arith.constant 0 : i32
    %c0_i32_1 = arith.constant 0 : i32
    return %arg1, %c0_i32, %c0_i32_0 : i32, i32, i32
  }
  func.func @transform_7(%arg0: i32, %arg1: i32) -> (i32, i32, i32) {
    %c0_i32 = arith.constant 0 : i32
    %c0_i32_0 = arith.constant 0 : i32
    %c0_i32_1 = arith.constant 0 : i32
    return %arg1, %c0_i32, %c0_i32_0 : i32, i32, i32
  }
  func.func @transform_8(%arg0: i32, %arg1: i32) -> (i32, i32, i32) {
    %c0_i32 = arith.constant 0 : i32
    %c0_i32_0 = arith.constant 0 : i32
    %c0_i32_1 = arith.constant 0 : i32
    return %arg1, %c0_i32, %c0_i32_0 : i32, i32, i32
  }
  func.func @transform_9(%arg0: i32, %arg1: i32) -> (i32, i32, i32) {
    %c0_i32 = arith.constant 0 : i32
    %c0_i32_0 = arith.constant 0 : i32
    %c0_i32_1 = arith.constant 0 : i32
    return %arg1, %c0_i32, %c0_i32_0 : i32, i32, i32
  }
  func.func @transform_10(%arg0: i32, %arg1: i32) -> (i32, i32, i32) {
    %c0_i32 = arith.constant 0 : i32
    %c0_i32_0 = arith.constant 0 : i32
    %c0_i32_1 = arith.constant 0 : i32
    return %arg1, %c0_i32, %c0_i32_0 : i32, i32, i32
  }
  func.func @transform_11(%arg0: i32, %arg1: i32) -> (i32, i32, i32) {
    %c0_i32 = arith.constant 0 : i32
    %c0_i32_0 = arith.constant 0 : i32
    %c0_i32_1 = arith.constant 0 : i32
    return %arg1, %c0_i32, %c0_i32_0 : i32, i32, i32
  }
  func.func @transform_12(%arg0: i32, %arg1: i32) -> (i32, i32, i32) {
    %c0_i32 = arith.constant 0 : i32
    %c0_i32_0 = arith.constant 0 : i32
    %c0_i32_1 = arith.constant 0 : i32
    return %arg1, %c0_i32, %c0_i32_0 : i32, i32, i32
  }
  func.func @transform_13(%arg0: i32, %arg1: i32) -> (i32, i32, i32) {
    %c0_i32 = arith.constant 0 : i32
    %c0_i32_0 = arith.constant 0 : i32
    %c0_i32_1 = arith.constant 0 : i32
    return %arg1, %c0_i32, %c0_i32_0 : i32, i32, i32
  }
  func.func @transform_14(%arg0: i32, %arg1: i32) -> (i32, i32, i32) {
    %c0_i32 = arith.constant 0 : i32
    %c0_i32_0 = arith.constant 0 : i32
    %c0_i32_1 = arith.constant 0 : i32
    return %arg1, %c0_i32, %c0_i32_0 : i32, i32, i32
  }
  func.func @transform_15(%arg0: i32, %arg1: i32) -> (i32, i32, i32) {
    %c0_i32 = arith.constant 0 : i32
    %c0_i32_0 = arith.constant 0 : i32
    %c0_i32_1 = arith.constant 0 : i32
    return %arg1, %c0_i32, %c0_i32_0 : i32, i32, i32
  }
  func.func @transform_16(%arg0: i32, %arg1: i32) -> (i32, i32, i32) {
    %c0_i32 = arith.constant 0 : i32
    %c0_i32_0 = arith.constant 0 : i32
    %c0_i32_1 = arith.constant 0 : i32
    return %arg0, %c0_i32, %c0_i32_0 : i32, i32, i32
  }
}

</mosaic_0001>

<llo_original>
// kernel: forward.1
$region0: #{forward.1}
  #allocation0 [shape = 'u32[]', space=smem, size = 0x4, offset = 0x4, fixed_abs, tag = 'smem constant byte address 0x4 - core index']
  #allocation1 [shape = 'u32[72,128]{1,0:T(1,128)}', space=vmem, size = 0x9000, scoped, tag = 'internal scratch']
  %s0 = inlined_call_operand.vmem [shape: f32[2,8,128], index: 0, kind: input, shape index: {}]
  %s1 = inlined_call_operand.vmem [shape: f32[2,1,8], index: 1, kind: input, shape index: {}]
  %s2 = inlined_call_operand.vmem [shape: f32[1,128], index: 2, kind: input, shape index: {}]
  %s3 = inlined_call_operand.vmem [shape: f32[1,128], index: 3, kind: input, shape index: {}]
  %s4 = inlined_call_operand.hbm [shape: bf16[2,128,384], index: 4, kind: input, shape index: {}]
  %s5 = inlined_call_operand.vmem [shape: f32[2,1,384], index: 5, kind: input, shape index: {}]
  %s6 = inlined_call_operand.vmem [shape: bf16[2,128,128], index: 6, kind: input, shape index: {}]
  %s7 = inlined_call_operand.vmem [shape: f32[2,1,128], index: 7, kind: input, shape index: {}]
  %s8 = inlined_call_operand.vmem [shape: f32[2,1,128], index: 8, kind: input, shape index: {}]
  %s9 = inlined_call_operand.vmem [shape: f32[2,1,128], index: 9, kind: input, shape index: {}]
  %s10 = inlined_call_operand.hbm [shape: bf16[2,128,512], index: 10, kind: input, shape index: {}]
  %s11 = inlined_call_operand.vmem [shape: f32[2,1,512], index: 11, kind: input, shape index: {}]
  %s12 = inlined_call_operand.hbm [shape: bf16[2,512,128], index: 12, kind: input, shape index: {}]
  %s13 = inlined_call_operand.vmem [shape: f32[2,1,128], index: 13, kind: input, shape index: {}]
  %s14 = inlined_call_operand.vmem [shape: f32[2,1,128], index: 14, kind: input, shape index: {}]
  %s15 = inlined_call_operand.vmem [shape: f32[2,1,128], index: 15, kind: input, shape index: {}]
  %s16 = inlined_call_operand.vmem [shape: f32[2,8,128], index: 16, kind: output, shape index: {}]
  %s17 = sld [smem:[#allocation0]]
  $region113: #{forward.1} parent=0
    _
  %s19 = ssub.s32 1, %s17
  %s20 = scalar_select 0, %s19, %s17
  $region1: #{forward.1} parent=0
    #allocation2 [shape = 'u8[196608]{0}', space=vmem, size = 0x30000, scoped, tag = 'input window, operand 4']
    #allocation3 [shape = 's32[2]{0}', space=sflag, size = 0x8, scoped, tag = 'scoped memory for forward.1']
    #allocation4 [shape = 'u8[262144]{0}', space=vmem, size = 0x40000, scoped, tag = 'input window, operand 10']
    #allocation5 [shape = 's32[2]{0}', space=sflag, size = 0x8, scoped, tag = 'scoped memory for forward.1']
    #allocation6 [shape = 'u8[262144]{0}', space=vmem, size = 0x40000, scoped, tag = 'input window, operand 12']
    %21 = vsyncpa [#allocation3], 0
    %s22 = scalar_lea.sflag [#allocation3], 1
    %23 = vsyncpa %s22, 0
    %24 = vsyncpa [#allocation5], 0
    %s25 = scalar_lea.sflag [#allocation5], 1
    %26 = vsyncpa %s25, 0
    loop: start=0, step=1, limit=6
    $region2: #{forward.1} parent=1 // loop_pre_header
      _
    $region3: #{forward.1} parent=1 // loop_header
      %s28 = sphi 0, %s32
      %p29 = scmp.ge.s32.totalorder %s28, 6
      %s35 = sphi 0, %s47
      %s36 = sphi 0, %s43
      %s37 = sphi 0, %s35
      %s38 = sphi 0, %s36
      %s39 = sphi 0, %s37
      %s40 = sphi 0, %s38
      %s50 = sphi 0, %s52
      %s53 = sphi 0, %s50
      %s54 = sphi 0, %s53
      %s70 = sphi 0, %s54
      %s76 = sphi 0, %s78
      %s79 = sphi 0, %s76
      %s80 = sphi 0, %s79
      %s96 = sphi 0, %s80
      %s100 = sphi 0, %s100
      %s102 = sphi 0, %s100
      %s103 = sphi 0, %s102
      %s117 = sphi 0, %s103
      %s121 = sphi 0, %s121
      %s123 = sphi 0, %s121
      %s124 = sphi 0, %s123
      %s138 = sphi 0, %s124
      %s144 = sphi 0, %s146
      %s147 = sphi 0, %s144
      %s148 = sphi 0, %s147
      %s164 = sphi 0, %s148
      %s170 = sphi 0, %s172
      %s173 = sphi 0, %s170
      %s174 = sphi 0, %s173
      %s190 = sphi 0, %s174
      %s196 = sphi 0, %s198
      %s199 = sphi 0, %s196
      %s200 = sphi 0, %s199
      %s216 = sphi 0, %s200
      %s222 = sphi 0, %s224
      %s225 = sphi 0, %s222
      %s226 = sphi 0, %s225
      %s242 = sphi 0, %s226
      %s248 = sphi 0, %s250
      %s251 = sphi 0, %s248
      %s252 = sphi 0, %s251
      %s268 = sphi 0, %s252
      %s274 = sphi 0, %s276
      %s277 = sphi 0, %s274
      %s278 = sphi 0, %s277
      %s294 = sphi 0, %s278
      %s300 = sphi 0, %s302
      %s303 = sphi 0, %s300
      %s304 = sphi 0, %s303
      %s320 = sphi 0, %s304
      %s326 = sphi 0, %s328
      %s329 = sphi 0, %s326
      %s330 = sphi 0, %s329
      %s346 = sphi 0, %s330
      %s352 = sphi 0, %s354
      %s355 = sphi 0, %s352
      %s356 = sphi 0, %s355
      %s372 = sphi 0, %s356
      %s378 = sphi 0, %s380
      %s381 = sphi 0, %s378
      %s382 = sphi 0, %s381
      %s398 = sphi 0, %s382
      %s404 = sphi 0, %s406
      %s407 = sphi 0, %s404
      %s408 = sphi 0, %s407
      %s424 = sphi 0, %s408
      %s430 = sphi 0, %s432
      %s433 = sphi 0, %s430
      %s434 = sphi 0, %s433
      %s450 = sphi 0, %s434
      %s456 = sphi 0, %s458
      %s459 = sphi 0, %s456
      %s460 = sphi 0, %s459
      %s476 = sphi 0, %s460
    $region4: #{forward.1} parent=1 // loop_header_branch
      %31 = sbr.rel (%p29) target = $region8
    $region5: #{forward.1} parent=1 // loop_body
      %s33 = ssub.s32 %s28, 1
      %s34 = ssub.s32 %s28, 2
      %s41 = sadd.s32 1, %s36
      %p42 = scmp.ge.s32.totalorder %s41, 2
      %s43 = scalar_select %p42, 0, %s41
      %s44 = sadd.s32 1, %s35
      %s45 = scalar_select %p42, %s44, %s35
      %p46 = scmp.ge.s32.totalorder %s45, 2
      %s47 = scalar_select %p46, 0, %s45
      %s48 = ssub.s32 %s35, %s47
      %p49 = scmp.eq.s32.totalorder %s48, 0
      %s51 = sadd.s32 %s50, 1
      %s52 = scalar_select %p49, %s50, %s51
      %p55 = pneg %p49
      %p56 = scmp.eq.s32.totalorder %s28, 3
      %p57 = por %p55, %p56
      %p58 = scmp.ne.s32.totalorder %s50, %s53
      %p59 = scmp.eq.s32.totalorder %s28, 0
      %p60 = por %p58, %p59
      %p61 = scmp.ne.s32.totalorder %s50, %s53
      %p62 = scmp.eq.s32.totalorder %s33, 3
      %p63 = por %p61, %p62
      %p64 = scmp.ne.s32.totalorder %s53, %s54
      %p65 = scmp.eq.s32.totalorder %s33, 0
      %p66 = por %p64, %p65
      %p67 = scmp.ne.s32.totalorder %s53, %s54
      %p68 = scmp.eq.s32.totalorder %s34, 3
      %p69 = por %p67, %p68
      %p71 = scmp.ne.s32.totalorder %s54, %s70
      %p72 = scmp.eq.s32.totalorder %s34, 0
      %p73 = por %p71, %p72
      %s74 = ssub.s32 %s35, %s47
      %p75 = scmp.eq.s32.totalorder %s74, 0
      %s77 = sadd.s32 %s76, 1
      %s78 = scalar_select %p75, %s76, %s77
      %p81 = pneg %p75
      %p82 = scmp.eq.s32.totalorder %s28, 3
      %p83 = por %p81, %p82
      %p84 = scmp.ne.s32.totalorder %s76, %s79
      %p85 = scmp.eq.s32.totalorder %s28, 0
      %p86 = por %p84, %p85
      %p87 = scmp.ne.s32.totalorder %s76, %s79
      %p88 = scmp.eq.s32.totalorder %s33, 3
      %p89 = por %p87, %p88
      %p90 = scmp.ne.s32.totalorder %s79, %s80
      %p91 = scmp.eq.s32.totalorder %s33, 0
      %p92 = por %p90, %p91
      %p93 = scmp.ne.s32.totalorder %s79, %s80
      %p94 = scmp.eq.s32.totalorder %s34, 3
      %p95 = por %p93, %p94
      %p97 = scmp.ne.s32.totalorder %s80, %s96
      %p98 = scmp.eq.s32.totalorder %s34, 0
      %p99 = por %p97, %p98
      %s101 = sadd.s32 %s100, 1
      %p104 = scmp.eq.s32.totalorder %s28, 3
      %p105 = scmp.ne.s32.totalorder %s100, %s102
      %p106 = scmp.eq.s32.totalorder %s28, 0
      %p107 = por %p105, %p106
      %p108 = scmp.ne.s32.totalorder %s100, %s102
      %p109 = scmp.eq.s32.totalorder %s33, 3
      %p110 = por %p108, %p109
      %p111 = scmp.ne.s32.totalorder %s102, %s103
      %p112 = scmp.eq.s32.totalorder %s33, 0
      %p113 = por %p111, %p112
      %p114 = scmp.ne.s32.totalorder %s102, %s103
      %p115 = scmp.eq.s32.totalorder %s34, 3
      %p116 = por %p114, %p115
      %p118 = scmp.ne.s32.totalorder %s103, %s117
      %p119 = scmp.eq.s32.totalorder %s34, 0
      %p120 = por %p118, %p119
      %s122 = sadd.s32 %s121, 1
      %p125 = scmp.eq.s32.totalorder %s28, 3
      %p126 = scmp.ne.s32.totalorder %s121, %s123
      %p127 = scmp.eq.s32.totalorder %s28, 0
      %p128 = por %p126, %p127
      %p129 = scmp.ne.s32.totalorder %s121, %s123
      %p130 = scmp.eq.s32.totalorder %s33, 3
      %p131 = por %p129, %p130
      %p132 = scmp.ne.s32.totalorder %s123, %s124
      %p133 = scmp.eq.s32.totalorder %s33, 0
      %p134 = por %p132, %p133
      %p135 = scmp.ne.s32.totalorder %s123, %s124
      %p136 = scmp.eq.s32.totalorder %s34, 3
      %p137 = por %p135, %p136
      %p139 = scmp.ne.s32.totalorder %s124, %s138
      %p140 = scmp.eq.s32.totalorder %s34, 0
      %p141 = por %p139, %p140
      %s142 = ssub.s32 %s36, %s43
      %p143 = scmp.eq.s32.totalorder %s142, 0
      %s145 = sadd.s32 %s144, 1
      %s146 = scalar_select %p143, %s144, %s145
      %p149 = pneg %p143
      %p150 = scmp.eq.s32.totalorder %s28, 3
      %p151 = por %p149, %p150
      %p152 = scmp.ne.s32.totalorder %s144, %s147
      %p153 = scmp.eq.s32.totalorder %s28, 0
      %p154 = por %p152, %p153
      %p155 = scmp.ne.s32.totalorder %s144, %s147
      %p156 = scmp.eq.s32.totalorder %s33, 3
      %p157 = por %p155, %p156
      %p158 = scmp.ne.s32.totalorder %s147, %s148
      %p159 = scmp.eq.s32.totalorder %s33, 0
      %p160 = por %p158, %p159
      %p161 = scmp.ne.s32.totalorder %s147, %s148
      %p162 = scmp.eq.s32.totalorder %s34, 3
      %p163 = por %p161, %p162
      %p165 = scmp.ne.s32.totalorder %s148, %s164
      %p166 = scmp.eq.s32.totalorder %s34, 0
      %p167 = por %p165, %p166
      %s168 = ssub.s32 %s36, %s43
      %p169 = scmp.eq.s32.totalorder %s168, 0
      %s171 = sadd.s32 %s170, 1
      %s172 = scalar_select %p169, %s170, %s171
      %p175 = pneg %p169
      %p176 = scmp.eq.s32.totalorder %s28, 3
      %p177 = por %p175, %p176
      %p178 = scmp.ne.s32.totalorder %s170, %s173
      %p179 = scmp.eq.s32.totalorder %s28, 0
      %p180 = por %p178, %p179
      %p181 = scmp.ne.s32.totalorder %s170, %s173
      %p182 = scmp.eq.s32.totalorder %s33, 3
      %p183 = por %p181, %p182
      %p184 = scmp.ne.s32.totalorder %s173, %s174
      %p185 = scmp.eq.s32.totalorder %s33, 0
      %p186 = por %p184, %p185
      %p187 = scmp.ne.s32.totalorder %s173, %s174
      %p188 = scmp.eq.s32.totalorder %s34, 3
      %p189 = por %p187, %p188
      %p191 = scmp.ne.s32.totalorder %s174, %s190
      %p192 = scmp.eq.s32.totalorder %s34, 0
      %p193 = por %p191, %p192
      %s194 = ssub.s32 %s36, %s43
      %p195 = scmp.eq.s32.totalorder %s194, 0
      %s197 = sadd.s32 %s196, 1
      %s198 = scalar_select %p195, %s196, %s197
      %p201 = pneg %p195
      %p202 = scmp.eq.s32.totalorder %s28, 3
      %p203 = por %p201, %p202
      %p204 = scmp.ne.s32.totalorder %s196, %s199
      %p205 = scmp.eq.s32.totalorder %s28, 0
      %p206 = por %p204, %p205
      %p207 = scmp.ne.s32.totalorder %s196, %s199
      %p208 = scmp.eq.s32.totalorder %s33, 3
      %p209 = por %p207, %p208
      %p210 = scmp.ne.s32.totalorder %s199, %s200
      %p211 = scmp.eq.s32.totalorder %s33, 0
      %p212 = por %p210, %p211
      %p213 = scmp.ne.s32.totalorder %s199, %s200
      %p214 = scmp.eq.s32.totalorder %s34, 3
      %p215 = por %p213, %p214
      %p217 = scmp.ne.s32.totalorder %s200, %s216
      %p218 = scmp.eq.s32.totalorder %s34, 0
      %p219 = por %p217, %p218
      %s220 = ssub.s32 %s36, %s43
      %p221 = scmp.eq.s32.totalorder %s220, 0
      %s223 = sadd.s32 %s222, 1
      %s224 = scalar_select %p221, %s222, %s223
      %p227 = pneg %p221
      %p228 = scmp.eq.s32.totalorder %s28, 3
      %p229 = por %p227, %p228
      %p230 = scmp.ne.s32.totalorder %s222, %s225
      %p231 = scmp.eq.s32.totalorder %s28, 0
      %p232 = por %p230, %p231
      %p233 = scmp.ne.s32.totalorder %s222, %s225
      %p234 = scmp.eq.s32.totalorder %s33, 3
      %p235 = por %p233, %p234
      %p236 = scmp.ne.s32.totalorder %s225, %s226
      %p237 = scmp.eq.s32.totalorder %s33, 0
      %p238 = por %p236, %p237
      %p239 = scmp.ne.s32.totalorder %s225, %s226
      %p240 = scmp.eq.s32.totalorder %s34, 3
      %p241 = por %p239, %p240
      %p243 = scmp.ne.s32.totalorder %s226, %s242
      %p244 = scmp.eq.s32.totalorder %s34, 0
      %p245 = por %p243, %p244
      %s246 = ssub.s32 %s36, %s43
      %p247 = scmp.eq.s32.totalorder %s246, 0
      %s249 = sadd.s32 %s248, 1
      %s250 = scalar_select %p247, %s248, %s249
      %p253 = pneg %p247
      %p254 = scmp.eq.s32.totalorder %s28, 3
      %p255 = por %p253, %p254
      %p256 = scmp.ne.s32.totalorder %s248, %s251
      %p257 = scmp.eq.s32.totalorder %s28, 0
      %p258 = por %p256, %p257
      %p259 = scmp.ne.s32.totalorder %s248, %s251
      %p260 = scmp.eq.s32.totalorder %s33, 3
      %p261 = por %p259, %p260
      %p262 = scmp.ne.s32.totalorder %s251, %s252
      %p263 = scmp.eq.s32.totalorder %s33, 0
      %p264 = por %p262, %p263
      %p265 = scmp.ne.s32.totalorder %s251, %s252
      %p266 = scmp.eq.s32.totalorder %s34, 3
      %p267 = por %p265, %p266
      %p269 = scmp.ne.s32.totalorder %s252, %s268
      %p270 = scmp.eq.s32.totalorder %s34, 0
      %p271 = por %p269, %p270
      %s272 = ssub.s32 %s36, %s43
      %p273 = scmp.eq.s32.totalorder %s272, 0
      %s275 = sadd.s32 %s274, 1
      %s276 = scalar_select %p273, %s274, %s275
      %p279 = pneg %p273
      %p280 = scmp.eq.s32.totalorder %s28, 3
      %p281 = por %p279, %p280
      %p282 = scmp.ne.s32.totalorder %s274, %s277
      %p283 = scmp.eq.s32.totalorder %s28, 0
      %p284 = por %p282, %p283
      %p285 = scmp.ne.s32.totalorder %s274, %s277
      %p286 = scmp.eq.s32.totalorder %s33, 3
      %p287 = por %p285, %p286
      %p288 = scmp.ne.s32.totalorder %s277, %s278
      %p289 = scmp.eq.s32.totalorder %s33, 0
      %p290 = por %p288, %p289
      %p291 = scmp.ne.s32.totalorder %s277, %s278
      %p292 = scmp.eq.s32.totalorder %s34, 3
      %p293 = por %p291, %p292
      %p295 = scmp.ne.s32.totalorder %s278, %s294
      %p296 = scmp.eq.s32.totalorder %s34, 0
      %p297 = por %p295, %p296
      %s298 = ssub.s32 %s36, %s43
      %p299 = scmp.eq.s32.totalorder %s298, 0
      %s301 = sadd.s32 %s300, 1
      %s302 = scalar_select %p299, %s300, %s301
      %p305 = pneg %p299
      %p306 = scmp.eq.s32.totalorder %s28, 3
      %p307 = por %p305, %p306
      %p308 = scmp.ne.s32.totalorder %s300, %s303
      %p309 = scmp.eq.s32.totalorder %s28, 0
      %p310 = por %p308, %p309
      %p311 = scmp.ne.s32.totalorder %s300, %s303
      %p312 = scmp.eq.s32.totalorder %s33, 3
      %p313 = por %p311, %p312
      %p314 = scmp.ne.s32.totalorder %s303, %s304
      %p315 = scmp.eq.s32.totalorder %s33, 0
      %p316 = por %p314, %p315
      %p317 = scmp.ne.s32.totalorder %s303, %s304
      %p318 = scmp.eq.s32.totalorder %s34, 3
      %p319 = por %p317, %p318
      %p321 = scmp.ne.s32.totalorder %s304, %s320
      %p322 = scmp.eq.s32.totalorder %s34, 0
      %p323 = por %p321, %p322
      %s324 = ssub.s32 %s36, %s43
      %p325 = scmp.eq.s32.totalorder %s324, 0
      %s327 = sadd.s32 %s326, 1
      %s328 = scalar_select %p325, %s326, %s327
      %p331 = pneg %p325
      %p332 = scmp.eq.s32.totalorder %s28, 3
      %p333 = por %p331, %p332
      %p334 = scmp.ne.s32.totalorder %s326, %s329
      %p335 = scmp.eq.s32.totalorder %s28, 0
      %p336 = por %p334, %p335
      %p337 = scmp.ne.s32.totalorder %s326, %s329
      %p338 = scmp.eq.s32.totalorder %s33, 3
      %p339 = por %p337, %p338
      %p340 = scmp.ne.s32.totalorder %s329, %s330
      %p341 = scmp.eq.s32.totalorder %s33, 0
      %p342 = por %p340, %p341
      %p343 = scmp.ne.s32.totalorder %s329, %s330
      %p344 = scmp.eq.s32.totalorder %s34, 3
      %p345 = por %p343, %p344
      %p347 = scmp.ne.s32.totalorder %s330, %s346
      %p348 = scmp.eq.s32.totalorder %s34, 0
      %p349 = por %p347, %p348
      %s350 = ssub.s32 %s36, %s43
      %p351 = scmp.eq.s32.totalorder %s350, 0
      %s353 = sadd.s32 %s352, 1
      %s354 = scalar_select %p351, %s352, %s353
      %p357 = pneg %p351
      %p358 = scmp.eq.s32.totalorder %s28, 3
      %p359 = por %p357, %p358
      %p360 = scmp.ne.s32.totalorder %s352, %s355
      %p361 = scmp.eq.s32.totalorder %s28, 0
      %p362 = por %p360, %p361
      %p363 = scmp.ne.s32.totalorder %s352, %s355
      %p364 = scmp.eq.s32.totalorder %s33, 3
      %p365 = por %p363, %p364
      %p366 = scmp.ne.s32.totalorder %s355, %s356
      %p367 = scmp.eq.s32.totalorder %s33, 0
      %p368 = por %p366, %p367
      %p369 = scmp.ne.s32.totalorder %s355, %s356
      %p370 = scmp.eq.s32.totalorder %s34, 3
      %p371 = por %p369, %p370
      %p373 = scmp.ne.s32.totalorder %s356, %s372
      %p374 = scmp.eq.s32.totalorder %s34, 0
      %p375 = por %p373, %p374
      %s376 = ssub.s32 %s36, %s43
      %p377 = scmp.eq.s32.totalorder %s376, 0
      %s379 = sadd.s32 %s378, 1
      %s380 = scalar_select %p377, %s378, %s379
      %p383 = pneg %p377
      %p384 = scmp.eq.s32.totalorder %s28, 3
      %p385 = por %p383, %p384
      %p386 = scmp.ne.s32.totalorder %s378, %s381
      %p387 = scmp.eq.s32.totalorder %s28, 0
      %p388 = por %p386, %p387
      %p389 = scmp.ne.s32.totalorder %s378, %s381
      %p390 = scmp.eq.s32.totalorder %s33, 3
      %p391 = por %p389, %p390
      %p392 = scmp.ne.s32.totalorder %s381, %s382
      %p393 = scmp.eq.s32.totalorder %s33, 0
      %p394 = por %p392, %p393
      %p395 = scmp.ne.s32.totalorder %s381, %s382
      %p396 = scmp.eq.s32.totalorder %s34, 3
      %p397 = por %p395, %p396
      %p399 = scmp.ne.s32.totalorder %s382, %s398
      %p400 = scmp.eq.s32.totalorder %s34, 0
      %p401 = por %p399, %p400
      %s402 = ssub.s32 %s36, %s43
      %p403 = scmp.eq.s32.totalorder %s402, 0
      %s405 = sadd.s32 %s404, 1
      %s406 = scalar_select %p403, %s404, %s405
      %p409 = pneg %p403
      %p410 = scmp.eq.s32.totalorder %s28, 3
      %p411 = por %p409, %p410
      %p412 = scmp.ne.s32.totalorder %s404, %s407
      %p413 = scmp.eq.s32.totalorder %s28, 0
      %p414 = por %p412, %p413
      %p415 = scmp.ne.s32.totalorder %s404, %s407
      %p416 = scmp.eq.s32.totalorder %s33, 3
      %p417 = por %p415, %p416
      %p418 = scmp.ne.s32.totalorder %s407, %s408
      %p419 = scmp.eq.s32.totalorder %s33, 0
      %p420 = por %p418, %p419
      %p421 = scmp.ne.s32.totalorder %s407, %s408
      %p422 = scmp.eq.s32.totalorder %s34, 3
      %p423 = por %p421, %p422
      %p425 = scmp.ne.s32.totalorder %s408, %s424
      %p426 = scmp.eq.s32.totalorder %s34, 0
      %p427 = por %p425, %p426
      %s428 = ssub.s32 %s36, %s43
      %p429 = scmp.eq.s32.totalorder %s428, 0
      %s431 = sadd.s32 %s430, 1
      %s432 = scalar_select %p429, %s430, %s431
      %p435 = pneg %p429
      %p436 = scmp.eq.s32.totalorder %s28, 3
      %p437 = por %p435, %p436
      %p438 = scmp.ne.s32.totalorder %s430, %s433
      %p439 = scmp.eq.s32.totalorder %s28, 0
      %p440 = por %p438, %p439
      %p441 = scmp.ne.s32.totalorder %s430, %s433
      %p442 = scmp.eq.s32.totalorder %s33, 3
      %p443 = por %p441, %p442
      %p444 = scmp.ne.s32.totalorder %s433, %s434
      %p445 = scmp.eq.s32.totalorder %s33, 0
      %p446 = por %p444, %p445
      %p447 = scmp.ne.s32.totalorder %s433, %s434
      %p448 = scmp.eq.s32.totalorder %s34, 3
      %p449 = por %p447, %p448
      %p451 = scmp.ne.s32.totalorder %s434, %s450
      %p452 = scmp.eq.s32.totalorder %s34, 0
      %p453 = por %p451, %p452
      %s454 = ssub.s32 %s35, %s47
      %p455 = scmp.eq.s32.totalorder %s454, 0
      %s457 = sadd.s32 %s456, 1
      %s458 = scalar_select %p455, %s456, %s457
      %p461 = pneg %p455
      %p462 = scmp.eq.s32.totalorder %s28, 3
      %p463 = por %p461, %p462
      %p464 = scmp.ne.s32.totalorder %s456, %s459
      %p465 = scmp.eq.s32.totalorder %s28, 0
      %p466 = por %p464, %p465
      %p467 = scmp.ne.s32.totalorder %s456, %s459
      %p468 = scmp.eq.s32.totalorder %s33, 3
      %p469 = por %p467, %p468
      %p470 = scmp.ne.s32.totalorder %s459, %s460
      %p471 = scmp.eq.s32.totalorder %s33, 0
      %p472 = por %p470, %p471
      %p473 = scmp.ne.s32.totalorder %s459, %s460
      %p474 = scmp.eq.s32.totalorder %s34, 3
      %p475 = por %p473, %p474
      %p477 = scmp.ne.s32.totalorder %s460, %s476
      %p478 = scmp.eq.s32.totalorder %s34, 0
      %p479 = por %p477, %p478
      %p480 = scmp.le.s32.totalorder 1, %s28
      %p481 = scmp.lt.s32.totalorder %s28, 5
      %p482 = pnand %p480, %p481
      %p483 = pneg %p482
      // Predicated region
      $region9: #{forward.1} parent=5 // pred_check
        _
      $region10: #{forward.1} parent=5 // pred_check_branch
        %485 = sbr.rel (%p482) target = $region12
      $region11: #{forward.1} parent=5 // pred_region
        %s486 = ssub.s32 %s28, 1
        // Predicated region
        $region13: #{forward.1} parent=11 // pred_check
          %p487 = pneg %p113
        $region14: #{forward.1} parent=11 // pred_check_branch
          %489 = sbr.rel (%p487) target = $region16
        $region15: #{forward.1} parent=11 // pred_region
          _
        $region16: #{forward.1} parent=11 // pred_fallthru
          _
        // Predicated region
        $region17: #{forward.1} parent=11 // pred_check
          %p490 = pneg %p134
        $region18: #{forward.1} parent=11 // pred_check_branch
          %492 = sbr.rel (%p490) target = $region20
        $region19: #{forward.1} parent=11 // pred_region
          _
        $region20: #{forward.1} parent=11 // pred_fallthru
          _
      $region12: #{forward.1} parent=5 // pred_fallthru
        _
      %p493 = scmp.lt.s32.totalorder %s28, 4
      // Predicated region
      $region21: #{forward.1} parent=5 // pred_check
        %p494 = pneg %p493
      $region22: #{forward.1} parent=5 // pred_check_branch
        %496 = sbr.rel (%p494) target = $region24
      $region23: #{forward.1} parent=5 // pred_region
        // Predicated region
        $region25: #{forward.1} parent=23 // pred_check
          %p497 = pneg %p60
        $region26: #{forward.1} parent=23 // pred_check_branch
          %499 = sbr.rel (%p497) target = $region28
        $region27: #{forward.1} parent=23 // pred_region
          %p500 = scmp.lt.s32.totalorder %s35, 1
          %s501 = scalar_select %p500, %s35, 1
          %s502 = smul.addr %s501, 8
          %s503 = scalar_lea.vmem %s0, %s502
        $region28: #{forward.1} parent=23 // pred_fallthru
          _
        // Predicated region
        $region29: #{forward.1} parent=23 // pred_check
          %p504 = pneg %p86
        $region30: #{forward.1} parent=23 // pred_check_branch
          %506 = sbr.rel (%p504) target = $region32
        $region31: #{forward.1} parent=23 // pred_region
          %p507 = scmp.lt.s32.totalorder %s35, 1
          %s508 = scalar_select %p507, %s35, 1
          %s509 = scalar_lea.vmem %s1, %s508
        $region32: #{forward.1} parent=23 // pred_fallthru
          _
        // Predicated region
        $region33: #{forward.1} parent=23 // pred_check
          %p510 = pneg %p154
        $region34: #{forward.1} parent=23 // pred_check_branch
          %512 = sbr.rel (%p510) target = $region36
        $region35: #{forward.1} parent=23 // pred_region
          %s513 = sand.u32 %s144, 1
          %s514 = scalar_lea.sflag [#allocation3], %s513
          %s515 = sand.u32 %s144, 1
          %s516 = smul.addr %s515, 192
          %s517 = scalar_lea.vmem [#allocation2], %s516
          %519 = vsyncadd %s514, 0
          %s520 = smul.addr %s36, 48
          %s521 = smul.addr %s520, 4
          %s522 = scalar_lea.hbm %s4, %s521
          %s523 = sshll.u32 %s522, 4
          %s524 = int_to_ptr.hbm [resolvable:$true] %s523
          %s525 = sshll.u32 %s517, 4
          %s526 = int_to_ptr.vmem [resolvable:$true] %s525
          %531 = dma.hbm_to_vmem [thread:$0]  %s524, 3072, %s526, %s514, 192, 192, 12
        $region36: #{forward.1} parent=23 // pred_fallthru
          _
        // Predicated region
        $region37: #{forward.1} parent=23 // pred_check
          %p532 = pneg %p180
        $region38: #{forward.1} parent=23 // pred_check_branch
          %534 = sbr.rel (%p532) target = $region40
        $region39: #{forward.1} parent=23 // pred_region
          %p535 = scmp.lt.s32.totalorder %s36, 1
          %s536 = scalar_select %p535, %s36, 1
          %s537 = smul.addr %s536, 3
          %s538 = scalar_lea.vmem %s5, %s537
        $region40: #{forward.1} parent=23 // pred_fallthru
          _
        // Predicated region
        $region41: #{forward.1} parent=23 // pred_check
          %p539 = pneg %p206
        $region42: #{forward.1} parent=23 // pred_check_branch
          %541 = sbr.rel (%p539) target = $region44
        $region43: #{forward.1} parent=23 // pred_region
          %p542 = scmp.lt.s32.totalorder %s36, 1
          %s543 = scalar_select %p542, %s36, 1
          %s544 = smul.addr %s543, 16
          %s545 = smul.addr %s544, 4
          %s546 = scalar_lea.vmem %s6, %s545
        $region44: #{forward.1} parent=23 // pred_fallthru
          _
        // Predicated region
        $region45: #{forward.1} parent=23 // pred_check
          %p547 = pneg %p232
        $region46: #{forward.1} parent=23 // pred_check_branch
          %549 = sbr.rel (%p547) target = $region48
        $region47: #{forward.1} parent=23 // pred_region
          %p550 = scmp.lt.s32.totalorder %s36, 1
          %s551 = scalar_select %p550, %s36, 1
          %s552 = scalar_lea.vmem %s7, %s551
        $region48: #{forward.1} parent=23 // pred_fallthru
          _
        // Predicated region
        $region49: #{forward.1} parent=23 // pred_check
          %p553 = pneg %p258
        $region50: #{forward.1} parent=23 // pred_check_branch
          %555 = sbr.rel (%p553) target = $region52
        $region51: #{forward.1} parent=23 // pred_region
          %p556 = scmp.lt.s32.totalorder %s36, 1
          %s557 = scalar_select %p556, %s36, 1
          %s558 = scalar_lea.vmem %s8, %s557
        $region52: #{forward.1} parent=23 // pred_fallthru
          _
        // Predicated region
        $region53: #{forward.1} parent=23 // pred_check
          %p559 = pneg %p284
        $region54: #{forward.1} parent=23 // pred_check_branch
          %561 = sbr.rel (%p559) target = $region56
        $region55: #{forward.1} parent=23 // pred_region
          %p562 = scmp.lt.s32.totalorder %s36, 1
          %s563 = scalar_select %p562, %s36, 1
          %s564 = scalar_lea.vmem %s9, %s563
        $region56: #{forward.1} parent=23 // pred_fallthru
          _
        // Predicated region
        $region57: #{forward.1} parent=23 // pred_check
          %p565 = pneg %p310
        $region58: #{forward.1} parent=23 // pred_check_branch
          %567 = sbr.rel (%p565) target = $region60
        $region59: #{forward.1} parent=23 // pred_region
          %s568 = sand.u32 %s28, 1
          %s569 = scalar_lea.sflag [#allocation5], %s568
          %s570 = sand.u32 %s300, 1
          %s571 = smul.addr %s570, 256
          %s572 = scalar_lea.vmem [#allocation4], %s571
          %574 = vsyncadd %s569, 0
          %s575 = smul.addr %s36, 64
          %s576 = smul.addr %s575, 4
          %s577 = scalar_lea.hbm %s10, %s576
          %s578 = sshll.u32 %s577, 4
          %s579 = int_to_ptr.hbm [resolvable:$true] %s578
          %s580 = sshll.u32 %s572, 4
          %s581 = int_to_ptr.vmem [resolvable:$true] %s580
          %586 = dma.hbm_to_vmem [thread:$0]  %s579, 4096, %s581, %s569, 256, 256, 16
        $region60: #{forward.1} parent=23 // pred_fallthru
          _
        // Predicated region
        $region61: #{forward.1} parent=23 // pred_check
          %p587 = pneg %p336
        $region62: #{forward.1} parent=23 // pred_check_branch
          %589 = sbr.rel (%p587) target = $region64
        $region63: #{forward.1} parent=23 // pred_region
          %p590 = scmp.lt.s32.totalorder %s36, 1
          %s591 = scalar_select %p590, %s36, 1
          %s592 = smul.addr %s591, 4
          %s593 = scalar_lea.vmem %s11, %s592
        $region64: #{forward.1} parent=23 // pred_fallthru
          _
        // Predicated region
        $region65: #{forward.1} parent=23 // pred_check
          %p594 = pneg %p362
        $region66: #{forward.1} parent=23 // pred_check_branch
          %596 = sbr.rel (%p594) target = $region68
        $region67: #{forward.1} parent=23 // pred_region
          %s597 = sand.u32 %s28, 1
          %s598 = scalar_lea.sflag [#allocation5], %s597
          %s599 = sand.u32 %s352, 1
          %s600 = smul.addr %s599, 256
          %s601 = scalar_lea.vmem [#allocation6], %s600
          %603 = vsyncadd %s598, 0
          %s604 = smul.addr %s36, 64
          %s605 = smul.addr %s604, 4
          %s606 = scalar_lea.hbm %s12, %s605
          %s607 = sshll.u32 %s606, 4
          %s608 = int_to_ptr.hbm [resolvable:$true] %s607
          %s609 = sshll.u32 %s601, 4
          %s610 = int_to_ptr.vmem [resolvable:$true] %s609
          %615 = dma.hbm_to_vmem [thread:$0]  %s608, 4096, %s610, %s598, 64, 64, 4
        $region68: #{forward.1} parent=23 // pred_fallthru
          _
        // Predicated region
        $region69: #{forward.1} parent=23 // pred_check
          %p616 = pneg %p388
        $region70: #{forward.1} parent=23 // pred_check_branch
          %618 = sbr.rel (%p616) target = $region72
        $region71: #{forward.1} parent=23 // pred_region
          %p619 = scmp.lt.s32.totalorder %s36, 1
          %s620 = scalar_select %p619, %s36, 1
          %s621 = scalar_lea.vmem %s13, %s620
        $region72: #{forward.1} parent=23 // pred_fallthru
          _
        // Predicated region
        $region73: #{forward.1} parent=23 // pred_check
          %p622 = pneg %p414
        $region74: #{forward.1} parent=23 // pred_check_branch
          %624 = sbr.rel (%p622) target = $region76
        $region75: #{forward.1} parent=23 // pred_region
          %p625 = scmp.lt.s32.totalorder %s36, 1
          %s626 = scalar_select %p625, %s36, 1
          %s627 = scalar_lea.vmem %s14, %s626
        $region76: #{forward.1} parent=23 // pred_fallthru
          _
        // Predicated region
        $region77: #{forward.1} parent=23 // pred_check
          %p628 = pneg %p440
        $region78: #{forward.1} parent=23 // pred_check_branch
          %630 = sbr.rel (%p628) target = $region80
        $region79: #{forward.1} parent=23 // pred_region
          %p631 = scmp.lt.s32.totalorder %s36, 1
          %s632 = scalar_select %p631, %s36, 1
          %s633 = scalar_lea.vmem %s15, %s632
        $region80: #{forward.1} parent=23 // pred_fallthru
          _
      $region24: #{forward.1} parent=5 // pred_fallthru
        _
      %p634 = scmp.le.s32.totalorder 1, %s28
      %p635 = scmp.lt.s32.totalorder %s28, 5
      %p636 = pnand %p634, %p635
      %p637 = pneg %p636
      // Predicated region
      $region81: #{forward.1} parent=5 // pred_check
        _
      $region82: #{forward.1} parent=5 // pred_check_branch
        %639 = sbr.rel (%p636) target = $region84
      $region83: #{forward.1} parent=5 // pred_region
        %s640 = ssub.s32 %s28, 1
        %s641 = sand.u32 %s147, 1
        %s642 = scalar_lea.sflag [#allocation3], %s641
        %s643 = sand.u32 %s147, 1
        %s644 = smul.addr %s643, 192
        %s645 = scalar_lea.vmem [#allocation2], %s644
        // Predicated region
        $region85: #{forward.1} parent=83 // pred_check
          %p646 = pneg %p160
        $region86: #{forward.1} parent=83 // pred_check_branch
          %648 = sbr.rel (%p646) target = $region88
        $region87: #{forward.1} parent=83 // pred_region
          %650 = dma.done %s642, 3072
        $region88: #{forward.1} parent=83 // pred_fallthru
          _
        %s651 = sand.u32 %s33, 1
        %s652 = scalar_lea.sflag [#allocation5], %s651
        %s653 = sand.u32 %s303, 1
        %s654 = smul.addr %s653, 256
        %s655 = scalar_lea.vmem [#allocation4], %s654
        // Predicated region
        $region89: #{forward.1} parent=83 // pred_check
          %p656 = pneg %p316
        $region90: #{forward.1} parent=83 // pred_check_branch
          %658 = sbr.rel (%p656) target = $region92
        $region91: #{forward.1} parent=83 // pred_region
          %660 = dma.done %s652, 4096
        $region92: #{forward.1} parent=83 // pred_fallthru
          _
        %s661 = sand.u32 %s33, 1
        %s662 = scalar_lea.sflag [#allocation5], %s661
        %s663 = sand.u32 %s355, 1
        %s664 = smul.addr %s663, 256
        %s665 = scalar_lea.vmem [#allocation6], %s664
        // Predicated region
        $region93: #{forward.1} parent=83 // pred_check
          %p666 = pneg %p368
        $region94: #{forward.1} parent=83 // pred_check_branch
          %668 = sbr.rel (%p666) target = $region96
        $region95: #{forward.1} parent=83 // pred_region
          %670 = dma.done %s662, 4096
        $region96: #{forward.1} parent=83 // pred_fallthru
          _
        %p671 = scmp.lt.s32.totalorder %s37, 1
        %s672 = scalar_select %p671, %s37, 1
        %s673 = smul.addr %s672, 8
        %s674 = scalar_lea.vmem %s0, %s673
        %p675 = pneg %p66
        %p676 = pneg %p63
        %p677 = scmp.lt.s32.totalorder %s37, 1
        %s678 = scalar_select %p677, %s37, 1
        %s679 = scalar_lea.vmem %s1, %s678
        %p680 = pneg %p92
        %p681 = pneg %p89
        %p682 = pneg %p113
        %p683 = pneg %p110
        %p684 = pneg %p134
        %p685 = pneg %p131
        %s686 = sand.u32 %s147, 1
        %s687 = scalar_lea.sflag [#allocation3], %s686
        %s688 = sand.u32 %s147, 1
        %s689 = smul.addr %s688, 192
        %s690 = scalar_lea.vmem [#allocation2], %s689
        %p691 = pneg %p160
        %p692 = pneg %p157
        %p693 = scmp.lt.s32.totalorder %s38, 1
        %s694 = scalar_select %p693, %s38, 1
        %s695 = smul.addr %s694, 3
        %s696 = scalar_lea.vmem %s5, %s695
        %p697 = pneg %p186
        %p698 = pneg %p183
        %p699 = scmp.lt.s32.totalorder %s38, 1
        %s700 = scalar_select %p699, %s38, 1
        %s701 = smul.addr %s700, 16
        %s702 = smul.addr %s701, 4
        %s703 = scalar_lea.vmem %s6, %s702
        %p704 = pneg %p212
        %p705 = pneg %p209
        %p706 = scmp.lt.s32.totalorder %s38, 1
        %s707 = scalar_select %p706, %s38, 1
        %s708 = scalar_lea.vmem %s7, %s707
        %p709 = pneg %p238
        %p710 = pneg %p235
        %p711 = scmp.lt.s32.totalorder %s38, 1
        %s712 = scalar_select %p711, %s38, 1
        %s713 = scalar_lea.vmem %s8, %s712
        %p714 = pneg %p264
        %p715 = pneg %p261
        %p716 = scmp.lt.s32.totalorder %s38, 1
        %s717 = scalar_select %p716, %s38, 1
        %s718 = scalar_lea.vmem %s9, %s717
        %p719 = pneg %p290
        %p720 = pneg %p287
        %s721 = sand.u32 %s33, 1
        %s722 = scalar_lea.sflag [#allocation5], %s721
        %s723 = sand.u32 %s303, 1
        %s724 = smul.addr %s723, 256
        %s725 = scalar_lea.vmem [#allocation4], %s724
        %p726 = pneg %p316
        %p727 = pneg %p313
        %p728 = scmp.lt.s32.totalorder %s38, 1
        %s729 = scalar_select %p728, %s38, 1
        %s730 = smul.addr %s729, 4
        %s731 = scalar_lea.vmem %s11, %s730
        %p732 = pneg %p342
        %p733 = pneg %p339
        %s734 = sand.u32 %s33, 1
        %s735 = scalar_lea.sflag [#allocation5], %s734
        %s736 = sand.u32 %s355, 1
        %s737 = smul.addr %s736, 256
        %s738 = scalar_lea.vmem [#allocation6], %s737
        %p739 = pneg %p368
        %p740 = pneg %p365
        %p741 = scmp.lt.s32.totalorder %s38, 1
        %s742 = scalar_select %p741, %s38, 1
        %s743 = scalar_lea.vmem %s13, %s742
        %p744 = pneg %p394
        %p745 = pneg %p391
        %p746 = scmp.lt.s32.totalorder %s38, 1
        %s747 = scalar_select %p746, %s38, 1
        %s748 = scalar_lea.vmem %s14, %s747
        %p749 = pneg %p420
        %p750 = pneg %p417
        %p751 = scmp.lt.s32.totalorder %s38, 1
        %s752 = scalar_select %p751, %s38, 1
        %s753 = scalar_lea.vmem %s15, %s752
        %p754 = pneg %p446
        %p755 = pneg %p443
        %p756 = pneg %p472
        %p757 = pneg %p469
        %p758 = scmp.lt.s32.totalorder %s37, 1
        %s759 = scalar_select %p758, %s37, 1
        %s760 = smul.addr %s759, 8
        %s761 = scalar_lea.vmem %s16, %s760
        %p762 = scmp.lt.s32.totalorder %s37, 1
        %s763 = scalar_select %p762, %s37, 1
        %s764 = smul.addr %s763, 8
        %s765 = scalar_lea.vmem %s0, %s764
        %p766 = scmp.lt.s32.totalorder %s37, 1
        %s767 = scalar_select %p766, %s37, 1
        %s768 = scalar_lea.vmem %s1, %s767
        %p769 = scmp.lt.s32.totalorder %s38, 1
        %s770 = scalar_select %p769, %s38, 1
        %s771 = smul.addr %s770, 3
        %s772 = scalar_lea.vmem %s5, %s771
        %p773 = scmp.lt.s32.totalorder %s38, 1
        %s774 = scalar_select %p773, %s38, 1
        %s775 = smul.addr %s774, 16
        %s776 = smul.addr %s775, 4
        %s777 = scalar_lea.vmem %s6, %s776
        %p778 = scmp.lt.s32.totalorder %s38, 1
        %s779 = scalar_select %p778, %s38, 1
        %s780 = scalar_lea.vmem %s7, %s779
        %p781 = scmp.lt.s32.totalorder %s38, 1
        %s782 = scalar_select %p781, %s38, 1
        %s783 = scalar_lea.vmem %s8, %s782
        %p784 = scmp.lt.s32.totalorder %s38, 1
        %s785 = scalar_select %p784, %s38, 1
        %s786 = scalar_lea.vmem %s9, %s785
        %p787 = scmp.lt.s32.totalorder %s38, 1
        %s788 = scalar_select %p787, %s38, 1
        %s789 = smul.addr %s788, 4
        %s790 = scalar_lea.vmem %s11, %s789
        %p791 = scmp.lt.s32.totalorder %s38, 1
        %s792 = scalar_select %p791, %s38, 1
        %s793 = scalar_lea.vmem %s13, %s792
        %p794 = scmp.lt.s32.totalorder %s38, 1
        %s795 = scalar_select %p794, %s38, 1
        %s796 = scalar_lea.vmem %s14, %s795
        %p797 = scmp.lt.s32.totalorder %s38, 1
        %s798 = scalar_select %p797, %s38, 1
        %s799 = scalar_lea.vmem %s15, %s798
        %p800 = scmp.lt.s32.totalorder %s37, 1
        %s801 = scalar_select %p800, %s37, 1
        %s802 = smul.addr %s801, 8
        %s803 = scalar_lea.vmem %s16, %s802
        %p805 = scmp.eq.s32.totalorder %s38, 0
        // Predicated region
        $region97: #{forward.1} parent=83 // pred_check
          %p806 = pneg %p805
        $region98: #{forward.1} parent=83 // pred_check_branch
          %808 = sbr.rel (%p806) target = $region100
        $region99: #{forward.1} parent=83 // pred_region
          %v809 = vld [vmem:[%s765] sm:$0xff]
          %v810 = vld [vmem:[%s2] sm:$0x1]
          %v811 = vld [vmem:[%s3] sm:$0x1]
          %812 = vadd.xlane.f32.xlu0 %v809
          %v813 = vpop.xlane.xlu0 %812
          %v814 = vrcp.pop 128.0
          %v815 = vmul.f32 128.0, %v814
          %v816 = vsub.f32 1.0, %v815
          %v817 = vmul.f32 %v814, %v816
          %v818 = vadd.f32 %v814, %v817
          %vm819 = vweird.f32 %v814
          %v820 = vsel %vm819, %v814, %v818
          %v821 = vmul.f32 %v813, %v820
          %v822 = vsub.f32 %v809, %v821
          %v823 = vmul.f32 %v822, %v822
          %824 = vadd.xlane.f32.xlu0 %v823
          %v825 = vpop.xlane.xlu0 %824
          %v826 = vmul.f32 %v825, %v820
          %v827 = vadd.f32 %v826, 1e-12
          %v828 = vrsqrt.pop %v827
          %v829 = vmul.f32 %v828, %v827
          %v830 = vmul.f32 %v829, %v828
          %v831 = vmul.f32 0.5, %v830
          %v832 = vsub.f32 1.5, %v831
          %v833 = vmul.f32 %v828, %v832
          %vm834 = vweird.f32 %v827
          %vm835 = vweird.f32 %v828
          %vm836 = vmor %vm834, %vm835
          %v837 = vsel %vm836, %v828, %v833
          %v838 = vmul.f32 %v822, %v837
          %v840 = vperm.slane %v810, 0
          %v842 = vmul.f32 %v838, %v840
          %v844 = vperm.slane %v811, 0
          %v846 = vadd.f32 %v842, %v844
          %847 = vst [vmem:[%s803] sm:$0xff] %v846
        $region100: #{forward.1} parent=83 // pred_fallthru
          _
        %v848 = vld [vmem:[%s803] sm:$0xff]
        %v849 = vld [vmem:[%s768] sm:$0x1]
        %v850 = vpack.c.bf16 %v848, %v848
        %v851 = vld [vmem:[%s645] sm:$0xff]
        %v852 = vld [vmem:[%s645 + $0x8] sm:$0xf]
        %v853 = vld [vmem:[%s645 + $0xc] sm:$0xff]
        %v854 = vld [vmem:[%s645 + $0x14] sm:$0xf]
        %v855 = vld [vmem:[%s645 + $0x18] sm:$0xff]
        %v856 = vld [vmem:[%s645 + $0x20] sm:$0xf]
        %v857 = vld [vmem:[%s645 + $0x24] sm:$0xff]
        %v858 = vld [vmem:[%s645 + $0x2c] sm:$0xf]
        %v859 = vld [vmem:[%s645 + $0x30] sm:$0xff]
        %v860 = vld [vmem:[%s645 + $0x38] sm:$0xf]
        %v861 = vld [vmem:[%s645 + $0x3c] sm:$0xff]
        %v862 = vld [vmem:[%s645 + $0x44] sm:$0xf]
        %v863 = vld [vmem:[%s645 + $0x48] sm:$0xff]
        %v864 = vld [vmem:[%s645 + $0x50] sm:$0xf]
        %v865 = vld [vmem:[%s645 + $0x54] sm:$0xff]
        %v866 = vld [vmem:[%s645 + $0x5c] sm:$0xf]
        %v867 = vld [vmem:[%s645 + $0x60] sm:$0xff]
        %v868 = vld [vmem:[%s645 + $0x68] sm:$0xf]
        %v869 = vld [vmem:[%s645 + $0x6c] sm:$0xff]
        %v870 = vld [vmem:[%s645 + $0x74] sm:$0xf]
        %v871 = vld [vmem:[%s645 + $0x78] sm:$0xff]
        %v872 = vld [vmem:[%s645 + $0x80] sm:$0xf]
        %v873 = vld [vmem:[%s645 + $0x84] sm:$0xff]
        %v874 = vld [vmem:[%s645 + $0x8c] sm:$0xf]
        %v875 = vld [vmem:[%s645 + $0x90] sm:$0xff]
        %v876 = vld [vmem:[%s645 + $0x98] sm:$0xf]
        %v877 = vld [vmem:[%s645 + $0x9c] sm:$0xff]
        %v878 = vld [vmem:[%s645 + $0xa4] sm:$0xf]
        %v879 = vld [vmem:[%s645 + $0xa8] sm:$0xff]
        %v880 = vld [vmem:[%s645 + $0xb0] sm:$0xf]
        %v881 = vld [vmem:[%s645 + $0xb4] sm:$0xff]
        %v882 = vld [vmem:[%s645 + $0xbc] sm:$0xf]
        %v883 = vld [vmem:[%s772] sm:$0x7]
        %v885 = vperm.slane %v883, 0
        %v886 = vperm.slane %v883, 1
        %v887 = vperm.slane %v883, 2
        %v923 = vunpack.c.l.b16 %v851
        %v924 = vunpack.c.h.b16 %v851
        %v925 = vunpack.c.l.b16 %v852
        %v926 = vunpack.c.l.b16 %v853
        %v927 = vunpack.c.h.b16 %v853
        %v928 = vunpack.c.l.b16 %v854
        %v929 = vunpack.c.l.b16 %v855
        %v930 = vunpack.c.h.b16 %v855
        %v931 = vunpack.c.l.b16 %v856
        %v932 = vunpack.c.l.b16 %v857
        %v933 = vunpack.c.h.b16 %v857
        %v934 = vunpack.c.l.b16 %v858
        %v935 = vunpack.c.l.b16 %v859
        %v936 = vunpack.c.h.b16 %v859
        %v937 = vunpack.c.l.b16 %v860
        %v938 = vunpack.c.l.b16 %v861
        %v939 = vunpack.c.h.b16 %v861
        %v940 = vunpack.c.l.b16 %v862
        %v941 = vunpack.c.l.b16 %v863
        %v942 = vunpack.c.h.b16 %v863
        %v943 = vunpack.c.l.b16 %v864
        %v944 = vunpack.c.l.b16 %v865
        %v945 = vunpack.c.h.b16 %v865
        %v946 = vunpack.c.l.b16 %v866
        %v947 = vunpack.c.l.b16 %v867
        %v948 = vunpack.c.h.b16 %v867
        %v949 = vunpack.c.l.b16 %v868
        %v950 = vunpack.c.l.b16 %v869
        %v951 = vunpack.c.h.b16 %v869
        %v952 = vunpack.c.l.b16 %v870
        %v953 = vunpack.c.l.b16 %v871
        %v954 = vunpack.c.h.b16 %v871
        %v955 = vunpack.c.l.b16 %v872
        %v956 = vunpack.c.l.b16 %v873
        %v957 = vunpack.c.h.b16 %v873
        %v958 = vunpack.c.l.b16 %v874
        %v959 = vunpack.c.l.b16 %v875
        %v960 = vunpack.c.h.b16 %v875
        %v961 = vunpack.c.l.b16 %v876
        %v962 = vunpack.c.l.b16 %v877
        %v963 = vunpack.c.h.b16 %v877
        %v964 = vunpack.c.l.b16 %v878
        %v965 = vunpack.c.l.b16 %v879
        %v966 = vunpack.c.h.b16 %v879
        %v967 = vunpack.c.l.b16 %v880
        %v968 = vunpack.c.l.b16 %v881
        %v969 = vunpack.c.h.b16 %v881
        %v970 = vunpack.c.l.b16 %v882
        %v971 = vpack.c.b16 %v926, %v923
        %v972 = vpack.c.b16 %v927, %v924
        %v973 = vpack.c.b16 %v928, %v925
        %v974 = vpack.c.b16 %v932, %v929
        %v975 = vpack.c.b16 %v933, %v930
        %v976 = vpack.c.b16 %v934, %v931
        %v977 = vpack.c.b16 %v938, %v935
        %v978 = vpack.c.b16 %v939, %v936
        %v979 = vpack.c.b16 %v940, %v937
        %v980 = vpack.c.b16 %v944, %v941
        %v981 = vpack.c.b16 %v945, %v942
        %v982 = vpack.c.b16 %v946, %v943
        %v983 = vpack.c.b16 %v950, %v947
        %v984 = vpack.c.b16 %v951, %v948
        %v985 = vpack.c.b16 %v952, %v949
        %v986 = vpack.c.b16 %v956, %v953
        %v987 = vpack.c.b16 %v957, %v954
        %v988 = vpack.c.b16 %v958, %v955
        %v989 = vpack.c.b16 %v962, %v959
        %v990 = vpack.c.b16 %v963, %v960
        %v991 = vpack.c.b16 %v964, %v961
        %v992 = vpack.c.b16 %v968, %v965
        %v993 = vpack.c.b16 %v969, %v966
        %v994 = vpack.c.b16 %v970, %v967
        %1019 = vmatpush.bf16.msra.mxu0 %v992
        %1020 = vmatpush.bf16.msra.mxu0 %v989
        %1021 = vmatpush.bf16.msra.mxu0 %v986
        %1022 = vmatpush.bf16.msra.mxu0 %v983
        %1023 = vmatpush.bf16.msra.mxu0 %v980
        %1024 = vmatpush.bf16.msra.mxu0 %v977
        %1025 = vmatpush.bf16.msra.mxu0 %v974
        %1026 = vmatpush.bf16.msra.mxu0 %v971
        %1027 = vmatmul.bf16.gmra.mxu0 %v850
        %v1028 = vpop.f32.mrf.mxu0
        %v1029 = vadd.f32 %v885, %v1028
        %v1030 = vpop.f32.mrf.mxu0
        %1031 = vdwg.mxu0
        %1032 = vmatpush.bf16.msra.mxu0 %v993
        %1033 = vmatpush.bf16.msra.mxu0 %v990
        %1034 = vmatpush.bf16.msra.mxu0 %v987
        %1035 = vmatpush.bf16.msra.mxu0 %v984
        %1036 = vmatpush.bf16.msra.mxu0 %v981
        %1037 = vmatpush.bf16.msra.mxu0 %v978
        %1038 = vmatpush.bf16.msra.mxu0 %v975
        %1039 = vmatpush.bf16.msra.mxu0 %v972
        %1040 = vmatmul.bf16.gmra.mxu0 %v850
        %v1041 = vpop.f32.mrf.mxu0
        %v1042 = vadd.f32 %v886, %v1041
        %v1043 = vpop.f32.mrf.mxu0
        %1044 = vdwg.mxu0
        %1045 = vmatpush.bf16.msra.mxu0 %v994
        %1046 = vmatpush.bf16.msra.mxu0 %v991
        %1047 = vmatpush.bf16.msra.mxu0 %v988
        %1048 = vmatpush.bf16.msra.mxu0 %v985
        %1049 = vmatpush.bf16.msra.mxu0 %v982
        %1050 = vmatpush.bf16.msra.mxu0 %v979
        %1051 = vmatpush.bf16.msra.mxu0 %v976
        %1052 = vmatpush.bf16.msra.mxu0 %v973
        %1053 = vmatmul.bf16.gmra.mxu0 %v850
        %v1054 = vpop.f32.mrf.mxu0
        %v1055 = vadd.f32 %v887, %v1054
        %v1056 = vpop.f32.mrf.mxu0
        %1057 = vdwg.mxu0
        %v1058 = vpack.c.bf16 %v1029, %v1029
        %v1059 = vpack.c.bf16 %v1042, %v1042
        %vm1060 = vcmask 261120
        %v1062 = vsel %vm1060, %v1058, 0
        %v1065 = vsel %vm1060, %v1059, 0
        %1067 = vmatpush.bf16.xpose.msra.mxu0 0
        %1068 = vmatpush.bf16.xpose.msra.mxu0 0
        %1069 = vmatpush.bf16.xpose.msra.mxu0 0
        %1070 = vmatpush.bf16.xpose.msra.mxu0 0
        %1071 = vmatpush.bf16.xpose.msra.mxu0 0
        %1072 = vmatpush.bf16.xpose.msra.mxu0 0
        %1073 = vmatpush.bf16.xpose.msra.mxu0 0
        %1074 = vmatpush.bf16.xpose.msra.mxu0 %v1065
        %1075 = vmatmul.bf16.gmra.mxu0 %v1062
        %v1076 = vpop.f32.mrf.mxu0
        %v1077 = vadd.f32 0.0, %v1076
        %v1078 = vpop.f32.mrf.mxu0
        %1079 = vdwg.mxu0
        %v1080 = vmul.f32 %v1077, 0.17677669
        %v1082 = vperm.slane %v849, 0
        %v1084 = vadd.f32 %v1080, %v1082
        %vm1085 = vcmask 64512
        %v1086 = vsel %vm1085, %v1084, -inf
        %1087 = vmax.xlane.f32.xlu0 %v1086
        %v1088 = vpop.xlane.xlu0 %1087
        %v1089 = vsub.f32 %v1084, %v1088
        %v1090 = vmul.f32 %v1089, 1.442695
        %v1091 = vpow.pop %v1090
        %v1092 = vsel %vm1085, %v1091, 0.0
        %1093 = vadd.xlane.f32.xlu0 %v1092
        %v1094 = vpop.xlane.xlu0 %1093
        %v1095 = vrcp.pop %v1094
        %v1096 = vmul.f32 %v1091, %v1095
        %v1097 = vpack.c.bf16 %v1096, %v1096
        %v1098 = vpack.c.bf16 %v1055, %v1055
        %v1100 = vsel %vm1085, %v1097, 0
        %vm1102 = vcmask 1043456
        %v1104 = vsel %vm1102, %v1098, 0
        %1106 = vmatpush.bf16.msra.mxu0 0
        %1107 = vmatpush.bf16.msra.mxu0 0
        %1108 = vmatpush.bf16.msra.mxu0 0
        %1109 = vmatpush.bf16.msra.mxu0 0
        %1110 = vmatpush.bf16.msra.mxu0 0
        %1111 = vmatpush.bf16.msra.mxu0 0
        %1112 = vmatpush.bf16.msra.mxu0 0
        %1113 = vmatpush.bf16.msra.mxu0 %v1104
        %1114 = vmatmul.bf16.gmra.mxu0 %v1100
        %v1115 = vpop.f32.mrf.mxu0
        %v1116 = vadd.f32 0.0, %v1115
        %v1117 = vpop.f32.mrf.mxu0
        %1118 = vdwg.mxu0
        %1120 = vrot.lane.b32.xlu0 %v1058, 96
        %v1121 = vpop.permute.xlu0 %1120
        %1123 = vrot.lane.b32.xlu0 %v1059, 96
        %v1124 = vpop.permute.xlu0 %1123
        %v1126 = vsel %vm1060, %v1121, 0
        %v1129 = vsel %vm1060, %v1124, 0
        %1131 = vmatpush.bf16.xpose.msra.mxu0 0
        %1132 = vmatpush.bf16.xpose.msra.mxu0 0
        %1133 = vmatpush.bf16.xpose.msra.mxu0 0
        %1134 = vmatpush.bf16.xpose.msra.mxu0 0
        %1135 = vmatpush.bf16.xpose.msra.mxu0 0
        %1136 = vmatpush.bf16.xpose.msra.mxu0 0
        %1137 = vmatpush.bf16.xpose.msra.mxu0 0
        %1138 = vmatpush.bf16.xpose.msra.mxu0 %v1129
        %1139 = vmatmul.bf16.gmra.mxu0 %v1126
        %v1140 = vpop.f32.mrf.mxu0
        %v1141 = vadd.f32 0.0, %v1140
        %v1142 = vpop.f32.mrf.mxu0
        %1143 = vdwg.mxu0
        %v1144 = vmul.f32 %v1141, 0.17677669
        %v1145 = vadd.f32 %v1144, %v1082
        %v1146 = vsel %vm1085, %v1145, -inf
        %1147 = vmax.xlane.f32.xlu0 %v1146
        %v1148 = vpop.xlane.xlu0 %1147
        %v1149 = vsub.f32 %v1145, %v1148
        %v1150 = vmul.f32 %v1149, 1.442695
        %v1151 = vpow.pop %v1150
        %v1152 = vsel %vm1085, %v1151, 0.0
        %1153 = vadd.xlane.f32.xlu0 %v1152
        %v1154 = vpop.xlane.xlu0 %1153
        %v1155 = vrcp.pop %v1154
        %v1156 = vmul.f32 %v1151, %v1155
        %v1157 = vpack.c.bf16 %v1156, %v1156
        %1159 = vrot.lane.b32.xlu0 %v1098, 96
        %v1160 = vpop.permute.xlu0 %1159
        %v1162 = vsel %vm1085, %v1157, 0
        %v1165 = vsel %vm1102, %v1160, 0
        %1167 = vmatpush.bf16.msra.mxu0 0
        %1168 = vmatpush.bf16.msra.mxu0 0
        %1169 = vmatpush.bf16.msra.mxu0 0
        %1170 = vmatpush.bf16.msra.mxu0 0
        %1171 = vmatpush.bf16.msra.mxu0 0
        %1172 = vmatpush.bf16.msra.mxu0 0
        %1173 = vmatpush.bf16.msra.mxu0 0
        %1174 = vmatpush.bf16.msra.mxu0 %v1165
        %1175 = vmatmul.bf16.gmra.mxu0 %v1162
        %v1176 = vpop.f32.mrf.mxu0
        %v1177 = vadd.f32 0.0, %v1176
        %v1178 = vpop.f32.mrf.mxu0
        %1179 = vdwg.mxu0
        %1180 = vrot.lane.b32.xlu0 %v1058, 64
        %v1181 = vpop.permute.xlu0 %1180
        %1182 = vrot.lane.b32.xlu0 %v1059, 64
        %v1183 = vpop.permute.xlu0 %1182
        %v1185 = vsel %vm1060, %v1181, 0
        %v1188 = vsel %vm1060, %v1183, 0
        %1190 = vmatpush.bf16.xpose.msra.mxu0 0
        %1191 = vmatpush.bf16.xpose.msra.mxu0 0
        %1192 = vmatpush.bf16.xpose.msra.mxu0 0
        %1193 = vmatpush.bf16.xpose.msra.mxu0 0
        %1194 = vmatpush.bf16.xpose.msra.mxu0 0
        %1195 = vmatpush.bf16.xpose.msra.mxu0 0
        %1196 = vmatpush.bf16.xpose.msra.mxu0 0
        %1197 = vmatpush.bf16.xpose.msra.mxu0 %v1188
        %1198 = vmatmul.bf16.gmra.mxu0 %v1185
        %v1199 = vpop.f32.mrf.mxu0
        %v1200 = vadd.f32 0.0, %v1199
        %v1201 = vpop.f32.mrf.mxu0
        %1202 = vdwg.mxu0
        %v1203 = vmul.f32 %v1200, 0.17677669
        %v1204 = vadd.f32 %v1203, %v1082
        %v1205 = vsel %vm1085, %v1204, -inf
        %1206 = vmax.xlane.f32.xlu0 %v1205
        %v1207 = vpop.xlane.xlu0 %1206
        %v1208 = vsub.f32 %v1204, %v1207
        %v1209 = vmul.f32 %v1208, 1.442695
        %v1210 = vpow.pop %v1209
        %v1211 = vsel %vm1085, %v1210, 0.0
        %1212 = vadd.xlane.f32.xlu0 %v1211
        %v1213 = vpop.xlane.xlu0 %1212
        %v1214 = vrcp.pop %v1213
        %v1215 = vmul.f32 %v1210, %v1214
        %v1216 = vpack.c.bf16 %v1215, %v1215
        %1217 = vrot.lane.b32.xlu0 %v1098, 64
        %v1218 = vpop.permute.xlu0 %1217
        %v1220 = vsel %vm1085, %v1216, 0
        %v1223 = vsel %vm1102, %v1218, 0
        %1225 = vmatpush.bf16.msra.mxu0 0
        %1226 = vmatpush.bf16.msra.mxu0 0
        %1227 = vmatpush.bf16.msra.mxu0 0
        %1228 = vmatpush.bf16.msra.mxu0 0
        %1229 = vmatpush.bf16.msra.mxu0 0
        %1230 = vmatpush.bf16.msra.mxu0 0
        %1231 = vmatpush.bf16.msra.mxu0 0
        %1232 = vmatpush.bf16.msra.mxu0 %v1223
        %1233 = vmatmul.bf16.gmra.mxu0 %v1220
        %v1234 = vpop.f32.mrf.mxu0
        %v1235 = vadd.f32 0.0, %v1234
        %v1236 = vpop.f32.mrf.mxu0
        %1237 = vdwg.mxu0
        %1238 = vrot.lane.b32.xlu0 %v1058, 32
        %v1239 = vpop.permute.xlu0 %1238
        %1240 = vrot.lane.b32.xlu0 %v1059, 32
        %v1241 = vpop.permute.xlu0 %1240
        %v1243 = vsel %vm1060, %v1239, 0
        %v1246 = vsel %vm1060, %v1241, 0
        %1248 = vmatpush.bf16.xpose.msra.mxu0 0
        %1249 = vmatpush.bf16.xpose.msra.mxu0 0
        %1250 = vmatpush.bf16.xpose.msra.mxu0 0
        %1251 = vmatpush.bf16.xpose.msra.mxu0 0
        %1252 = vmatpush.bf16.xpose.msra.mxu0 0
        %1253 = vmatpush.bf16.xpose.msra.mxu0 0
        %1254 = vmatpush.bf16.xpose.msra.mxu0 0
        %1255 = vmatpush.bf16.xpose.msra.mxu0 %v1246
        %1256 = vmatmul.bf16.gmra.mxu0 %v1243
        %v1257 = vpop.f32.mrf.mxu0
        %v1258 = vadd.f32 0.0, %v1257
        %v1259 = vpop.f32.mrf.mxu0
        %1260 = vdwg.mxu0
        %v1261 = vmul.f32 %v1258, 0.17677669
        %v1262 = vadd.f32 %v1261, %v1082
        %v1263 = vsel %vm1085, %v1262, -inf
        %1264 = vmax.xlane.f32.xlu0 %v1263
        %v1265 = vpop.xlane.xlu0 %1264
        %v1266 = vsub.f32 %v1262, %v1265
        %v1267 = vmul.f32 %v1266, 1.442695
        %v1268 = vpow.pop %v1267
        %v1269 = vsel %vm1085, %v1268, 0.0
        %1270 = vadd.xlane.f32.xlu0 %v1269
        %v1271 = vpop.xlane.xlu0 %1270
        %v1272 = vrcp.pop %v1271
        %v1273 = vmul.f32 %v1268, %v1272
        %v1274 = vpack.c.bf16 %v1273, %v1273
        %1275 = vrot.lane.b32.xlu0 %v1098, 32
        %v1276 = vpop.permute.xlu0 %1275
        %v1278 = vsel %vm1085, %v1274, 0
        %v1281 = vsel %vm1102, %v1276, 0
        %1283 = vmatpush.bf16.msra.mxu0 0
        %1284 = vmatpush.bf16.msra.mxu0 0
        %1285 = vmatpush.bf16.msra.mxu0 0
        %1286 = vmatpush.bf16.msra.mxu0 0
        %1287 = vmatpush.bf16.msra.mxu0 0
        %1288 = vmatpush.bf16.msra.mxu0 0
        %1289 = vmatpush.bf16.msra.mxu0 0
        %1290 = vmatpush.bf16.msra.mxu0 %v1281
        %1291 = vmatmul.bf16.gmra.mxu0 %v1278
        %v1292 = vpop.f32.mrf.mxu0
        %v1293 = vadd.f32 0.0, %v1292
        %v1294 = vpop.f32.mrf.mxu0
        %1295 = vdwg.mxu0
        %1297 = vrot.lane.b32.xlu0 %v1177, 32
        %v1298 = vpop.permute.xlu0 %1297
        %1301 = vrot.lane.b32.xlu0 %v1235, 64
        %v1302 = vpop.permute.xlu0 %1301
        %1305 = vrot.lane.b32.xlu0 %v1293, 96
        %v1306 = vpop.permute.xlu0 %1305
        %v1308 = vsel %vm1060, %v1116, %v1298
        %vm1309 = vcmask 523264
        %v1310 = vsel %vm1309, %v1308, %v1302
        %vm1311 = vcmask 785408
        %v1312 = vsel %vm1311, %v1310, %v1306
        %v1313 = vpack.c.bf16 %v1312, %v1312
        %v1314 = vld [vmem:[%s777] sm:$0xf]
        %v1315 = vld [vmem:[%s777 + $0x4] sm:$0xf]
        %v1316 = vld [vmem:[%s777 + $0x8] sm:$0xf]
        %v1317 = vld [vmem:[%s777 + $0xc] sm:$0xf]
        %v1318 = vld [vmem:[%s777 + $0x10] sm:$0xf]
        %v1319 = vld [vmem:[%s777 + $0x14] sm:$0xf]
        %v1320 = vld [vmem:[%s777 + $0x18] sm:$0xf]
        %v1321 = vld [vmem:[%s777 + $0x1c] sm:$0xf]
        %v1322 = vld [vmem:[%s777 + $0x20] sm:$0xf]
        %v1323 = vld [vmem:[%s777 + $0x24] sm:$0xf]
        %v1324 = vld [vmem:[%s777 + $0x28] sm:$0xf]
        %v1325 = vld [vmem:[%s777 + $0x2c] sm:$0xf]
        %v1326 = vld [vmem:[%s777 + $0x30] sm:$0xf]
        %v1327 = vld [vmem:[%s777 + $0x34] sm:$0xf]
        %v1328 = vld [vmem:[%s777 + $0x38] sm:$0xf]
        %v1329 = vld [vmem:[%s777 + $0x3c] sm:$0xf]
        %v1330 = vld [vmem:[%s780] sm:$0x1]
        %v1332 = vperm.slane %v1330, 0
        %v1350 = vunpack.c.l.b16 %v1314
        %v1351 = vunpack.c.l.b16 %v1315
        %v1352 = vunpack.c.l.b16 %v1316
        %v1353 = vunpack.c.l.b16 %v1317
        %v1354 = vunpack.c.l.b16 %v1318
        %v1355 = vunpack.c.l.b16 %v1319
        %v1356 = vunpack.c.l.b16 %v1320
        %v1357 = vunpack.c.l.b16 %v1321
        %v1358 = vunpack.c.l.b16 %v1322
        %v1359 = vunpack.c.l.b16 %v1323
        %v1360 = vunpack.c.l.b16 %v1324
        %v1361 = vunpack.c.l.b16 %v1325
        %v1362 = vunpack.c.l.b16 %v1326
        %v1363 = vunpack.c.l.b16 %v1327
        %v1364 = vunpack.c.l.b16 %v1328
        %v1365 = vunpack.c.l.b16 %v1329
        %v1366 = vpack.c.b16 %v1351, %v1350
        %v1367 = vpack.c.b16 %v1353, %v1352
        %v1368 = vpack.c.b16 %v1355, %v1354
        %v1369 = vpack.c.b16 %v1357, %v1356
        %v1370 = vpack.c.b16 %v1359, %v1358
        %v1371 = vpack.c.b16 %v1361, %v1360
        %v1372 = vpack.c.b16 %v1363, %v1362
        %v1373 = vpack.c.b16 %v1365, %v1364
        %1382 = vmatpush.bf16.msra.mxu0 %v1373
        %1383 = vmatpush.bf16.msra.mxu0 %v1372
        %1384 = vmatpush.bf16.msra.mxu0 %v1371
        %1385 = vmatpush.bf16.msra.mxu0 %v1370
        %1386 = vmatpush.bf16.msra.mxu0 %v1369
        %1387 = vmatpush.bf16.msra.mxu0 %v1368
        %1388 = vmatpush.bf16.msra.mxu0 %v1367
        %1389 = vmatpush.bf16.msra.mxu0 %v1366
        %1390 = vmatmul.bf16.gmra.mxu0 %v1313
        %v1391 = vpop.f32.mrf.mxu0
        %v1392 = vadd.f32 %v1332, %v1391
        %v1393 = vpop.f32.mrf.mxu0
        %1394 = vdwg.mxu0
        %v1395 = vadd.f32 %v1392, %v848
        %v1396 = vld [vmem:[%s783] sm:$0x1]
        %v1397 = vld [vmem:[%s786] sm:$0x1]
        %1398 = vadd.xlane.f32.xlu0 %v1395
        %v1399 = vpop.xlane.xlu0 %1398
        %v1400 = vrcp.pop 128.0
        %v1401 = vmul.f32 128.0, %v1400
        %v1402 = vsub.f32 1.0, %v1401
        %v1403 = vmul.f32 %v1400, %v1402
        %v1404 = vadd.f32 %v1400, %v1403
        %vm1405 = vweird.f32 %v1400
        %v1406 = vsel %vm1405, %v1400, %v1404
        %v1407 = vmul.f32 %v1399, %v1406
        %v1408 = vsub.f32 %v1395, %v1407
        %v1409 = vmul.f32 %v1408, %v1408
        %1410 = vadd.xlane.f32.xlu0 %v1409
        %v1411 = vpop.xlane.xlu0 %1410
        %v1412 = vmul.f32 %v1411, %v1406
        %v1413 = vadd.f32 %v1412, 1e-12
        %v1414 = vrsqrt.pop %v1413
        %v1415 = vmul.f32 %v1414, %v1413
        %v1416 = vmul.f32 %v1415, %v1414
        %v1417 = vmul.f32 0.5, %v1416
        %v1418 = vsub.f32 1.5, %v1417
        %v1419 = vmul.f32 %v1414, %v1418
        %vm1420 = vweird.f32 %v1413
        %vm1421 = vweird.f32 %v1414
        %vm1422 = vmor %vm1420, %vm1421
        %v1423 = vsel %vm1422, %v1414, %v1419
        %v1424 = vmul.f32 %v1408, %v1423
        %v1426 = vperm.slane %v1396, 0
        %v1428 = vmul.f32 %v1424, %v1426
        %v1430 = vperm.slane %v1397, 0
        %v1432 = vadd.f32 %v1428, %v1430
        %v1433 = vpack.c.bf16 %v1432, %v1432
        %v1434 = vld [vmem:[%s655] sm:$0xff]
        %v1435 = vld [vmem:[%s655 + $0x8] sm:$0xff]
        %v1436 = vld [vmem:[%s655 + $0x10] sm:$0xff]
        %v1437 = vld [vmem:[%s655 + $0x18] sm:$0xff]
        %v1438 = vld [vmem:[%s655 + $0x20] sm:$0xff]
        %v1439 = vld [vmem:[%s655 + $0x28] sm:$0xff]
        %v1440 = vld [vmem:[%s655 + $0x30] sm:$0xff]
        %v1441 = vld [vmem:[%s655 + $0x38] sm:$0xff]
        %v1442 = vld [vmem:[%s655 + $0x40] sm:$0xff]
        %v1443 = vld [vmem:[%s655 + $0x48] sm:$0xff]
        %v1444 = vld [vmem:[%s655 + $0x50] sm:$0xff]
        %v1445 = vld [vmem:[%s655 + $0x58] sm:$0xff]
        %v1446 = vld [vmem:[%s655 + $0x60] sm:$0xff]
        %v1447 = vld [vmem:[%s655 + $0x68] sm:$0xff]
        %v1448 = vld [vmem:[%s655 + $0x70] sm:$0xff]
        %v1449 = vld [vmem:[%s655 + $0x78] sm:$0xff]
        %v1450 = vld [vmem:[%s655 + $0x80] sm:$0xff]
        %v1451 = vld [vmem:[%s655 + $0x88] sm:$0xff]
        %v1452 = vld [vmem:[%s655 + $0x90] sm:$0xff]
        %v1453 = vld [vmem:[%s655 + $0x98] sm:$0xff]
        %v1454 = vld [vmem:[%s655 + $0xa0] sm:$0xff]
        %v1455 = vld [vmem:[%s655 + $0xa8] sm:$0xff]
        %v1456 = vld [vmem:[%s655 + $0xb0] sm:$0xff]
        %v1457 = vld [vmem:[%s655 + $0xb8] sm:$0xff]
        %v1458 = vld [vmem:[%s655 + $0xc0] sm:$0xff]
        %v1459 = vld [vmem:[%s655 + $0xc8] sm:$0xff]
        %v1460 = vld [vmem:[%s655 + $0xd0] sm:$0xff]
        %v1461 = vld [vmem:[%s655 + $0xd8] sm:$0xff]
        %v1462 = vld [vmem:[%s655 + $0xe0] sm:$0xff]
        %v1463 = vld [vmem:[%s655 + $0xe8] sm:$0xff]
        %v1464 = vld [vmem:[%s655 + $0xf0] sm:$0xff]
        %v1465 = vld [vmem:[%s655 + $0xf8] sm:$0xff]
        %v1466 = vld [vmem:[%s790] sm:$0xf]
        %v1468 = vperm.slane %v1466, 0
        %v1469 = vperm.slane %v1466, 1
        %v1470 = vperm.slane %v1466, 2
        %v1471 = vperm.slane %v1466, 3
        %v1508 = vunpack.c.l.b16 %v1434
        %v1509 = vunpack.c.h.b16 %v1434
        %v1510 = vunpack.c.l.b16 %v1435
        %v1511 = vunpack.c.h.b16 %v1435
        %v1512 = vunpack.c.l.b16 %v1436
        %v1513 = vunpack.c.h.b16 %v1436
        %v1514 = vunpack.c.l.b16 %v1437
        %v1515 = vunpack.c.h.b16 %v1437
        %v1516 = vunpack.c.l.b16 %v1438
        %v1517 = vunpack.c.h.b16 %v1438
        %v1518 = vunpack.c.l.b16 %v1439
        %v1519 = vunpack.c.h.b16 %v1439
        %v1520 = vunpack.c.l.b16 %v1440
        %v1521 = vunpack.c.h.b16 %v1440
        %v1522 = vunpack.c.l.b16 %v1441
        %v1523 = vunpack.c.h.b16 %v1441
        %v1524 = vunpack.c.l.b16 %v1442
        %v1525 = vunpack.c.h.b16 %v1442
        %v1526 = vunpack.c.l.b16 %v1443
        %v1527 = vunpack.c.h.b16 %v1443
        %v1528 = vunpack.c.l.b16 %v1444
        %v1529 = vunpack.c.h.b16 %v1444
        %v1530 = vunpack.c.l.b16 %v1445
        %v1531 = vunpack.c.h.b16 %v1445
        %v1532 = vunpack.c.l.b16 %v1446
        %v1533 = vunpack.c.h.b16 %v1446
        %v1534 = vunpack.c.l.b16 %v1447
        %v1535 = vunpack.c.h.b16 %v1447
        %v1536 = vunpack.c.l.b16 %v1448
        %v1537 = vunpack.c.h.b16 %v1448
        %v1538 = vunpack.c.l.b16 %v1449
        %v1539 = vunpack.c.h.b16 %v1449
        %v1540 = vunpack.c.l.b16 %v1450
        %v1541 = vunpack.c.h.b16 %v1450
        %v1542 = vunpack.c.l.b16 %v1451
        %v1543 = vunpack.c.h.b16 %v1451
        %v1544 = vunpack.c.l.b16 %v1452
        %v1545 = vunpack.c.h.b16 %v1452
        %v1546 = vunpack.c.l.b16 %v1453
        %v1547 = vunpack.c.h.b16 %v1453
        %v1548 = vunpack.c.l.b16 %v1454
        %v1549 = vunpack.c.h.b16 %v1454
        %v1550 = vunpack.c.l.b16 %v1455
        %v1551 = vunpack.c.h.b16 %v1455
        %v1552 = vunpack.c.l.b16 %v1456
        %v1553 = vunpack.c.h.b16 %v1456
        %v1554 = vunpack.c.l.b16 %v1457
        %v1555 = vunpack.c.h.b16 %v1457
        %v1556 = vunpack.c.l.b16 %v1458
        %v1557 = vunpack.c.h.b16 %v1458
        %v1558 = vunpack.c.l.b16 %v1459
        %v1559 = vunpack.c.h.b16 %v1459
        %v1560 = vunpack.c.l.b16 %v1460
        %v1561 = vunpack.c.h.b16 %v1460
        %v1562 = vunpack.c.l.b16 %v1461
        %v1563 = vunpack.c.h.b16 %v1461
        %v1564 = vunpack.c.l.b16 %v1462
        %v1565 = vunpack.c.h.b16 %v1462
        %v1566 = vunpack.c.l.b16 %v1463
        %v1567 = vunpack.c.h.b16 %v1463
        %v1568 = vunpack.c.l.b16 %v1464
        %v1569 = vunpack.c.h.b16 %v1464
        %v1570 = vunpack.c.l.b16 %v1465
        %v1571 = vunpack.c.h.b16 %v1465
        %v1572 = vpack.c.b16 %v1512, %v1508
        %v1573 = vpack.c.b16 %v1513, %v1509
        %v1574 = vpack.c.b16 %v1514, %v1510
        %v1575 = vpack.c.b16 %v1515, %v1511
        %v1576 = vpack.c.b16 %v1520, %v1516
        %v1577 = vpack.c.b16 %v1521, %v1517
        %v1578 = vpack.c.b16 %v1522, %v1518
        %v1579 = vpack.c.b16 %v1523, %v1519
        %v1580 = vpack.c.b16 %v1528, %v1524
        %v1581 = vpack.c.b16 %v1529, %v1525
        %v1582 = vpack.c.b16 %v1530, %v1526
        %v1583 = vpack.c.b16 %v1531, %v1527
        %v1584 = vpack.c.b16 %v1536, %v1532
        %v1585 = vpack.c.b16 %v1537, %v1533
        %v1586 = vpack.c.b16 %v1538, %v1534
        %v1587 = vpack.c.b16 %v1539, %v1535
        %v1588 = vpack.c.b16 %v1544, %v1540
        %v1589 = vpack.c.b16 %v1545, %v1541
        %v1590 = vpack.c.b16 %v1546, %v1542
        %v1591 = vpack.c.b16 %v1547, %v1543
        %v1592 = vpack.c.b16 %v1552, %v1548
        %v1593 = vpack.c.b16 %v1553, %v1549
        %v1594 = vpack.c.b16 %v1554, %v1550
        %v1595 = vpack.c.b16 %v1555, %v1551
        %v1596 = vpack.c.b16 %v1560, %v1556
        %v1597 = vpack.c.b16 %v1561, %v1557
        %v1598 = vpack.c.b16 %v1562, %v1558
        %v1599 = vpack.c.b16 %v1563, %v1559
        %v1600 = vpack.c.b16 %v1568, %v1564
        %v1601 = vpack.c.b16 %v1569, %v1565
        %v1602 = vpack.c.b16 %v1570, %v1566
        %v1603 = vpack.c.b16 %v1571, %v1567
        %1636 = vmatpush.bf16.msra.mxu0 %v1600
        %1637 = vmatpush.bf16.msra.mxu0 %v1596
        %1638 = vmatpush.bf16.msra.mxu0 %v1592
        %1639 = vmatpush.bf16.msra.mxu0 %v1588
        %1640 = vmatpush.bf16.msra.mxu0 %v1584
        %1641 = vmatpush.bf16.msra.mxu0 %v1580
        %1642 = vmatpush.bf16.msra.mxu0 %v1576
        %1643 = vmatpush.bf16.msra.mxu0 %v1572
        %1644 = vmatmul.bf16.gmra.mxu0 %v1433
        %v1645 = vpop.f32.mrf.mxu0
        %v1646 = vadd.f32 %v1468, %v1645
        %v1647 = vpop.f32.mrf.mxu0
        %1648 = vdwg.mxu0
        %1649 = vmatpush.bf16.msra.mxu0 %v1601
        %1650 = vmatpush.bf16.msra.mxu0 %v1597
        %1651 = vmatpush.bf16.msra.mxu0 %v1593
        %1652 = vmatpush.bf16.msra.mxu0 %v1589
        %1653 = vmatpush.bf16.msra.mxu0 %v1585
        %1654 = vmatpush.bf16.msra.mxu0 %v1581
        %1655 = vmatpush.bf16.msra.mxu0 %v1577
        %1656 = vmatpush.bf16.msra.mxu0 %v1573
        %1657 = vmatmul.bf16.gmra.mxu0 %v1433
        %v1658 = vpop.f32.mrf.mxu0
        %v1659 = vadd.f32 %v1469, %v1658
        %v1660 = vpop.f32.mrf.mxu0
        %1661 = vdwg.mxu0
        %1662 = vmatpush.bf16.msra.mxu0 %v1602
        %1663 = vmatpush.bf16.msra.mxu0 %v1598
        %1664 = vmatpush.bf16.msra.mxu0 %v1594
        %1665 = vmatpush.bf16.msra.mxu0 %v1590
        %1666 = vmatpush.bf16.msra.mxu0 %v1586
        %1667 = vmatpush.bf16.msra.mxu0 %v1582
        %1668 = vmatpush.bf16.msra.mxu0 %v1578
        %1669 = vmatpush.bf16.msra.mxu0 %v1574
        %1670 = vmatmul.bf16.gmra.mxu0 %v1433
        %v1671 = vpop.f32.mrf.mxu0
        %v1672 = vadd.f32 %v1470, %v1671
        %v1673 = vpop.f32.mrf.mxu0
        %1674 = vdwg.mxu0
        %1675 = vmatpush.bf16.msra.mxu0 %v1603
        %1676 = vmatpush.bf16.msra.mxu0 %v1599
        %1677 = vmatpush.bf16.msra.mxu0 %v1595
        %1678 = vmatpush.bf16.msra.mxu0 %v1591
        %1679 = vmatpush.bf16.msra.mxu0 %v1587
        %1680 = vmatpush.bf16.msra.mxu0 %v1583
        %1681 = vmatpush.bf16.msra.mxu0 %v1579
        %1682 = vmatpush.bf16.msra.mxu0 %v1575
        %1683 = vmatmul.bf16.gmra.mxu0 %v1433
        %v1684 = vpop.f32.mrf.mxu0
        %v1685 = vadd.f32 %v1471, %v1684
        %v1686 = vpop.f32.mrf.mxu0
        %1687 = vdwg.mxu0
        %v1688 = vmul.f32 %v1646, 0.5
        %v1689 = vmul.f32 %v1659, 0.5
        %v1690 = vmul.f32 %v1672, 0.5
        %v1691 = vmul.f32 %v1685, 0.5
        %v1692 = vmul.f32 %v1646, 0.70710677
        %v1693 = vmul.f32 %v1659, 0.70710677
        %v1694 = vmul.f32 %v1672, 0.70710677
        %v1695 = vmul.f32 %v1685, 0.70710677
        %v1696 = vand.u32 2147483647, %v1692
        %v1697 = vand.u32 2147483647, %v1693
        %v1698 = vand.u32 2147483647, %v1694
        %v1699 = vand.u32 2147483647, %v1695
        %v1700 = vmul.f32 %v1696, 0.3275911
        %v1701 = vmul.f32 %v1697, 0.3275911
        %v1702 = vmul.f32 %v1698, 0.3275911
        %v1703 = vmul.f32 %v1699, 0.3275911
        %v1704 = vadd.f32 %v1700, 1.0
        %v1705 = vadd.f32 %v1701, 1.0
        %v1706 = vadd.f32 %v1702, 1.0
        %v1707 = vadd.f32 %v1703, 1.0
        %v1708 = vrcp.pop %v1704
        %v1709 = vmul.f32 %v1704, %v1708
        %v1710 = vsub.f32 1.0, %v1709
        %v1711 = vmul.f32 %v1708, %v1710
        %v1712 = vadd.f32 %v1708, %v1711
        %vm1713 = vweird.f32 %v1704
        %vm1714 = vweird.f32 %v1708
        %vm1715 = vmor %vm1713, %vm1714
        %v1716 = vsel %vm1715, %v1708, %v1712
        %v1717 = vand.u32 2147483647, %v1704
        %vm1718 = vcmp.eq.f32.partialorder %v1717, 8.507059e+37
        %v1719 = vand.u32 %v1704, 2147483648
        %v1720 = vor.u32 1.1754944e-38, %v1719
        %v1721 = vsel %vm1718, %v1720, %v1716
        %v1722 = vmul.f32 1.0, %v1721
        %v1723 = vrcp.pop %v1705
        %v1724 = vmul.f32 %v1705, %v1723
        %v1725 = vsub.f32 1.0, %v1724
        %v1726 = vmul.f32 %v1723, %v1725
        %v1727 = vadd.f32 %v1723, %v1726
        %vm1728 = vweird.f32 %v1705
        %vm1729 = vweird.f32 %v1723
        %vm1730 = vmor %vm1728, %vm1729
        %v1731 = vsel %vm1730, %v1723, %v1727
        %v1732 = vand.u32 2147483647, %v1705
        %vm1733 = vcmp.eq.f32.partialorder %v1732, 8.507059e+37
        %v1734 = vand.u32 %v1705, 2147483648
        %v1735 = vor.u32 1.1754944e-38, %v1734
        %v1736 = vsel %vm1733, %v1735, %v1731
        %v1737 = vmul.f32 1.0, %v1736
        %v1738 = vrcp.pop %v1706
        %v1739 = vmul.f32 %v1706, %v1738
        %v1740 = vsub.f32 1.0, %v1739
        %v1741 = vmul.f32 %v1738, %v1740
        %v1742 = vadd.f32 %v1738, %v1741
        %vm1743 = vweird.f32 %v1706
        %vm1744 = vweird.f32 %v1738
        %vm1745 = vmor %vm1743, %vm1744
        %v1746 = vsel %vm1745, %v1738, %v1742
        %v1747 = vand.u32 2147483647, %v1706
        %vm1748 = vcmp.eq.f32.partialorder %v1747, 8.507059e+37
        %v1749 = vand.u32 %v1706, 2147483648
        %v1750 = vor.u32 1.1754944e-38, %v1749
        %v1751 = vsel %vm1748, %v1750, %v1746
        %v1752 = vmul.f32 1.0, %v1751
        %v1753 = vrcp.pop %v1707
        %v1754 = vmul.f32 %v1707, %v1753
        %v1755 = vsub.f32 1.0, %v1754
        %v1756 = vmul.f32 %v1753, %v1755
        %v1757 = vadd.f32 %v1753, %v1756
        %vm1758 = vweird.f32 %v1707
        %vm1759 = vweird.f32 %v1753
        %vm1760 = vmor %vm1758, %vm1759
        %v1761 = vsel %vm1760, %v1753, %v1757
        %v1762 = vand.u32 2147483647, %v1707
        %vm1763 = vcmp.eq.f32.partialorder %v1762, 8.507059e+37
        %v1764 = vand.u32 %v1707, 2147483648
        %v1765 = vor.u32 1.1754944e-38, %v1764
        %v1766 = vsel %vm1763, %v1765, %v1761
        %v1767 = vmul.f32 1.0, %v1766
        %v1768 = vmul.f32 %v1722, 1.0614054
        %v1769 = vmul.f32 %v1737, 1.0614054
        %v1770 = vmul.f32 %v1752, 1.0614054
        %v1771 = vmul.f32 %v1767, 1.0614054
        %v1772 = vadd.f32 %v1768, -1.4531521
        %v1773 = vadd.f32 %v1769, -1.4531521
        %v1774 = vadd.f32 %v1770, -1.4531521
        %v1775 = vadd.f32 %v1771, -1.4531521
        %v1776 = vmul.f32 %v1772, %v1722
        %v1777 = vmul.f32 %v1773, %v1737
        %v1778 = vmul.f32 %v1774, %v1752
        %v1779 = vmul.f32 %v1775, %v1767
        %v1780 = vadd.f32 %v1776, 1.4214138
        %v1781 = vadd.f32 %v1777, 1.4214138
        %v1782 = vadd.f32 %v1778, 1.4214138
        %v1783 = vadd.f32 %v1779, 1.4214138
        %v1784 = vmul.f32 %v1780, %v1722
        %v1785 = vmul.f32 %v1781, %v1737
        %v1786 = vmul.f32 %v1782, %v1752
        %v1787 = vmul.f32 %v1783, %v1767
        %v1788 = vadd.f32 %v1784, -0.28449672
        %v1789 = vadd.f32 %v1785, -0.28449672
        %v1790 = vadd.f32 %v1786, -0.28449672
        %v1791 = vadd.f32 %v1787, -0.28449672
        %v1792 = vmul.f32 %v1788, %v1722
        %v1793 = vmul.f32 %v1789, %v1737
        %v1794 = vmul.f32 %v1790, %v1752
        %v1795 = vmul.f32 %v1791, %v1767
        %v1796 = vadd.f32 %v1792, 0.2548296
        %v1797 = vadd.f32 %v1793, 0.2548296
        %v1798 = vadd.f32 %v1794, 0.2548296
        %v1799 = vadd.f32 %v1795, 0.2548296
        %v1800 = vmul.f32 %v1796, %v1722
        %v1801 = vmul.f32 %v1797, %v1737
        %v1802 = vmul.f32 %v1798, %v1752
        %v1803 = vmul.f32 %v1799, %v1767
        %v1804 = vsub.f32 0.0, %v1696
        %v1805 = vsub.f32 0.0, %v1697
        %v1806 = vsub.f32 0.0, %v1698
        %v1807 = vsub.f32 0.0, %v1699
        %v1808 = vmul.f32 %v1804, %v1696
        %v1809 = vmul.f32 %v1805, %v1697
        %v1810 = vmul.f32 %v1806, %v1698
        %v1811 = vmul.f32 %v1807, %v1699
        %v1812 = vmul.f32 %v1808, 1.442695
        %v1813 = vpow.pop %v1812
        %v1814 = vmul.f32 %v1809, 1.442695
        %v1815 = vpow.pop %v1814
        %v1816 = vmul.f32 %v1810, 1.442695
        %v1817 = vpow.pop %v1816
        %v1818 = vmul.f32 %v1811, 1.442695
        %v1819 = vpow.pop %v1818
        %v1820 = vmul.f32 %v1800, %v1813
        %v1821 = vmul.f32 %v1801, %v1815
        %v1822 = vmul.f32 %v1802, %v1817
        %v1823 = vmul.f32 %v1803, %v1819
        %v1824 = vsub.f32 1.0, %v1820
        %v1825 = vsub.f32 1.0, %v1821
        %v1826 = vsub.f32 1.0, %v1822
        %v1827 = vsub.f32 1.0, %v1823
        %vm1828 = vcmp.lt.f32.partialorder %v1692, 0.0
        %vm1829 = vcmp.lt.f32.partialorder %v1693, 0.0
        %vm1830 = vcmp.lt.f32.partialorder %v1694, 0.0
        %vm1831 = vcmp.lt.f32.partialorder %v1695, 0.0
        %v1832 = vsub.f32 0.0, %v1824
        %v1833 = vsub.f32 0.0, %v1825
        %v1834 = vsub.f32 0.0, %v1826
        %v1835 = vsub.f32 0.0, %v1827
        %v1836 = vsel %vm1828, %v1832, %v1824
        %v1837 = vsel %vm1829, %v1833, %v1825
        %v1838 = vsel %vm1830, %v1834, %v1826
        %v1839 = vsel %vm1831, %v1835, %v1827
        %v1840 = vadd.f32 %v1836, 1.0
        %v1841 = vadd.f32 %v1837, 1.0
        %v1842 = vadd.f32 %v1838, 1.0
        %v1843 = vadd.f32 %v1839, 1.0
        %v1844 = vmul.f32 %v1688, %v1840
        %v1845 = vmul.f32 %v1689, %v1841
        %v1846 = vmul.f32 %v1690, %v1842
        %v1847 = vmul.f32 %v1691, %v1843
        %v1848 = vpack.c.bf16 %v1844, %v1844
        %v1849 = vpack.c.bf16 %v1845, %v1845
        %v1850 = vpack.c.bf16 %v1846, %v1846
        %v1851 = vpack.c.bf16 %v1847, %v1847
        %v1852 = vld [vmem:[%s665] sm:$0xf]
        %v1853 = vld [vmem:[%s665 + $0x4] sm:$0xf]
        %v1854 = vld [vmem:[%s665 + $0x8] sm:$0xf]
        %v1855 = vld [vmem:[%s665 + $0xc] sm:$0xf]
        %v1856 = vld [vmem:[%s665 + $0x10] sm:$0xf]
        %v1857 = vld [vmem:[%s665 + $0x14] sm:$0xf]
        %v1858 = vld [vmem:[%s665 + $0x18] sm:$0xf]
        %v1859 = vld [vmem:[%s665 + $0x1c] sm:$0xf]
        %v1860 = vld [vmem:[%s665 + $0x20] sm:$0xf]
        %v1861 = vld [vmem:[%s665 + $0x24] sm:$0xf]
        %v1862 = vld [vmem:[%s665 + $0x28] sm:$0xf]
        %v1863 = vld [vmem:[%s665 + $0x2c] sm:$0xf]
        %v1864 = vld [vmem:[%s665 + $0x30] sm:$0xf]
        %v1865 = vld [vmem:[%s665 + $0x34] sm:$0xf]
        %v1866 = vld [vmem:[%s665 + $0x38] sm:$0xf]
        %v1867 = vld [vmem:[%s665 + $0x3c] sm:$0xf]
        %v1868 = vld [vmem:[%s665 + $0x40] sm:$0xf]
        %v1869 = vld [vmem:[%s665 + $0x44] sm:$0xf]
        %v1870 = vld [vmem:[%s665 + $0x48] sm:$0xf]
        %v1871 = vld [vmem:[%s665 + $0x4c] sm:$0xf]
        %v1872 = vld [vmem:[%s665 + $0x50] sm:$0xf]
        %v1873 = vld [vmem:[%s665 + $0x54] sm:$0xf]
        %v1874 = vld [vmem:[%s665 + $0x58] sm:$0xf]
        %v1875 = vld [vmem:[%s665 + $0x5c] sm:$0xf]
        %v1876 = vld [vmem:[%s665 + $0x60] sm:$0xf]
        %v1877 = vld [vmem:[%s665 + $0x64] sm:$0xf]
        %v1878 = vld [vmem:[%s665 + $0x68] sm:$0xf]
        %v1879 = vld [vmem:[%s665 + $0x6c] sm:$0xf]
        %v1880 = vld [vmem:[%s665 + $0x70] sm:$0xf]
        %v1881 = vld [vmem:[%s665 + $0x74] sm:$0xf]
        %v1882 = vld [vmem:[%s665 + $0x78] sm:$0xf]
        %v1883 = vld [vmem:[%s665 + $0x7c] sm:$0xf]
        %v1884 = vld [vmem:[%s665 + $0x80] sm:$0xf]
        %v1885 = vld [vmem:[%s665 + $0x84] sm:$0xf]
        %v1886 = vld [vmem:[%s665 + $0x88] sm:$0xf]
        %v1887 = vld [vmem:[%s665 + $0x8c] sm:$0xf]
        %v1888 = vld [vmem:[%s665 + $0x90] sm:$0xf]
        %v1889 = vld [vmem:[%s665 + $0x94] sm:$0xf]
        %v1890 = vld [vmem:[%s665 + $0x98] sm:$0xf]
        %v1891 = vld [vmem:[%s665 + $0x9c] sm:$0xf]
        %v1892 = vld [vmem:[%s665 + $0xa0] sm:$0xf]
        %v1893 = vld [vmem:[%s665 + $0xa4] sm:$0xf]
        %v1894 = vld [vmem:[%s665 + $0xa8] sm:$0xf]
        %v1895 = vld [vmem:[%s665 + $0xac] sm:$0xf]
        %v1896 = vld [vmem:[%s665 + $0xb0] sm:$0xf]
        %v1897 = vld [vmem:[%s665 + $0xb4] sm:$0xf]
        %v1898 = vld [vmem:[%s665 + $0xb8] sm:$0xf]
        %v1899 = vld [vmem:[%s665 + $0xbc] sm:$0xf]
        %v1900 = vld [vmem:[%s665 + $0xc0] sm:$0xf]
        %v1901 = vld [vmem:[%s665 + $0xc4] sm:$0xf]
        %v1902 = vld [vmem:[%s665 + $0xc8] sm:$0xf]
        %v1903 = vld [vmem:[%s665 + $0xcc] sm:$0xf]
        %v1904 = vld [vmem:[%s665 + $0xd0] sm:$0xf]
        %v1905 = vld [vmem:[%s665 + $0xd4] sm:$0xf]
        %v1906 = vld [vmem:[%s665 + $0xd8] sm:$0xf]
        %v1907 = vld [vmem:[%s665 + $0xdc] sm:$0xf]
        %v1908 = vld [vmem:[%s665 + $0xe0] sm:$0xf]
        %v1909 = vld [vmem:[%s665 + $0xe4] sm:$0xf]
        %v1910 = vld [vmem:[%s665 + $0xe8] sm:$0xf]
        %v1911 = vld [vmem:[%s665 + $0xec] sm:$0xf]
        %v1912 = vld [vmem:[%s665 + $0xf0] sm:$0xf]
        %v1913 = vld [vmem:[%s665 + $0xf4] sm:$0xf]
        %v1914 = vld [vmem:[%s665 + $0xf8] sm:$0xf]
        %v1915 = vld [vmem:[%s665 + $0xfc] sm:$0xf]
        %v1916 = vld [vmem:[%s793] sm:$0x1]
        %v1918 = vperm.slane %v1916, 0
        %v1984 = vunpack.c.l.b16 %v1852
        %v1985 = vunpack.c.l.b16 %v1853
        %v1986 = vunpack.c.l.b16 %v1854
        %v1987 = vunpack.c.l.b16 %v1855
        %v1988 = vunpack.c.l.b16 %v1856
        %v1989 = vunpack.c.l.b16 %v1857
        %v1990 = vunpack.c.l.b16 %v1858
        %v1991 = vunpack.c.l.b16 %v1859
        %v1992 = vunpack.c.l.b16 %v1860
        %v1993 = vunpack.c.l.b16 %v1861
        %v1994 = vunpack.c.l.b16 %v1862
        %v1995 = vunpack.c.l.b16 %v1863
        %v1996 = vunpack.c.l.b16 %v1864
        %v1997 = vunpack.c.l.b16 %v1865
        %v1998 = vunpack.c.l.b16 %v1866
        %v1999 = vunpack.c.l.b16 %v1867
        %v2000 = vunpack.c.l.b16 %v1868
        %v2001 = vunpack.c.l.b16 %v1869
        %v2002 = vunpack.c.l.b16 %v1870
        %v2003 = vunpack.c.l.b16 %v1871
        %v2004 = vunpack.c.l.b16 %v1872
        %v2005 = vunpack.c.l.b16 %v1873
        %v2006 = vunpack.c.l.b16 %v1874
        %v2007 = vunpack.c.l.b16 %v1875
        %v2008 = vunpack.c.l.b16 %v1876
        %v2009 = vunpack.c.l.b16 %v1877
        %v2010 = vunpack.c.l.b16 %v1878
        %v2011 = vunpack.c.l.b16 %v1879
        %v2012 = vunpack.c.l.b16 %v1880
        %v2013 = vunpack.c.l.b16 %v1881
        %v2014 = vunpack.c.l.b16 %v1882
        %v2015 = vunpack.c.l.b16 %v1883
        %v2016 = vunpack.c.l.b16 %v1884
        %v2017 = vunpack.c.l.b16 %v1885
        %v2018 = vunpack.c.l.b16 %v1886
        %v2019 = vunpack.c.l.b16 %v1887
        %v2020 = vunpack.c.l.b16 %v1888
        %v2021 = vunpack.c.l.b16 %v1889
        %v2022 = vunpack.c.l.b16 %v1890
        %v2023 = vunpack.c.l.b16 %v1891
        %v2024 = vunpack.c.l.b16 %v1892
        %v2025 = vunpack.c.l.b16 %v1893
        %v2026 = vunpack.c.l.b16 %v1894
        %v2027 = vunpack.c.l.b16 %v1895
        %v2028 = vunpack.c.l.b16 %v1896
        %v2029 = vunpack.c.l.b16 %v1897
        %v2030 = vunpack.c.l.b16 %v1898
        %v2031 = vunpack.c.l.b16 %v1899
        %v2032 = vunpack.c.l.b16 %v1900
        %v2033 = vunpack.c.l.b16 %v1901
        %v2034 = vunpack.c.l.b16 %v1902
        %v2035 = vunpack.c.l.b16 %v1903
        %v2036 = vunpack.c.l.b16 %v1904
        %v2037 = vunpack.c.l.b16 %v1905
        %v2038 = vunpack.c.l.b16 %v1906
        %v2039 = vunpack.c.l.b16 %v1907
        %v2040 = vunpack.c.l.b16 %v1908
        %v2041 = vunpack.c.l.b16 %v1909
        %v2042 = vunpack.c.l.b16 %v1910
        %v2043 = vunpack.c.l.b16 %v1911
        %v2044 = vunpack.c.l.b16 %v1912
        %v2045 = vunpack.c.l.b16 %v1913
        %v2046 = vunpack.c.l.b16 %v1914
        %v2047 = vunpack.c.l.b16 %v1915
        %v2048 = vpack.c.b16 %v1985, %v1984
        %v2049 = vpack.c.b16 %v1987, %v1986
        %v2050 = vpack.c.b16 %v1989, %v1988
        %v2051 = vpack.c.b16 %v1991, %v1990
        %v2052 = vpack.c.b16 %v1993, %v1992
        %v2053 = vpack.c.b16 %v1995, %v1994
        %v2054 = vpack.c.b16 %v1997, %v1996
        %v2055 = vpack.c.b16 %v1999, %v1998
        %v2056 = vpack.c.b16 %v2001, %v2000
        %v2057 = vpack.c.b16 %v2003, %v2002
        %v2058 = vpack.c.b16 %v2005, %v2004
        %v2059 = vpack.c.b16 %v2007, %v2006
        %v2060 = vpack.c.b16 %v2009, %v2008
        %v2061 = vpack.c.b16 %v2011, %v2010
        %v2062 = vpack.c.b16 %v2013, %v2012
        %v2063 = vpack.c.b16 %v2015, %v2014
        %v2064 = vpack.c.b16 %v2017, %v2016
        %v2065 = vpack.c.b16 %v2019, %v2018
        %v2066 = vpack.c.b16 %v2021, %v2020
        %v2067 = vpack.c.b16 %v2023, %v2022
        %v2068 = vpack.c.b16 %v2025, %v2024
        %v2069 = vpack.c.b16 %v2027, %v2026
        %v2070 = vpack.c.b16 %v2029, %v2028
        %v2071 = vpack.c.b16 %v2031, %v2030
        %v2072 = vpack.c.b16 %v2033, %v2032
        %v2073 = vpack.c.b16 %v2035, %v2034
        %v2074 = vpack.c.b16 %v2037, %v2036
        %v2075 = vpack.c.b16 %v2039, %v2038
        %v2076 = vpack.c.b16 %v2041, %v2040
        %v2077 = vpack.c.b16 %v2043, %v2042
        %v2078 = vpack.c.b16 %v2045, %v2044
        %v2079 = vpack.c.b16 %v2047, %v2046
        %2112 = vmatpush.bf16.msra.mxu0 %v2055
        %2113 = vmatpush.bf16.msra.mxu0 %v2054
        %2114 = vmatpush.bf16.msra.mxu0 %v2053
        %2115 = vmatpush.bf16.msra.mxu0 %v2052
        %2116 = vmatpush.bf16.msra.mxu0 %v2051
        %2117 = vmatpush.bf16.msra.mxu0 %v2050
        %2118 = vmatpush.bf16.msra.mxu0 %v2049
        %2119 = vmatpush.bf16.msra.mxu0 %v2048
        %2120 = vmatmul.bf16.gmra.mxu0 %v1848
        %v2121 = vpop.f32.mrf.mxu0
        %v2122 = vadd.f32 %v1918, %v2121
        %v2123 = vpop.f32.mrf.mxu0
        %2124 = vdwg.mxu0
        %2125 = vmatpush.bf16.msra.mxu0 %v2063
        %2126 = vmatpush.bf16.msra.mxu0 %v2062
        %2127 = vmatpush.bf16.msra.mxu0 %v2061
        %2128 = vmatpush.bf16.msra.mxu0 %v2060
        %2129 = vmatpush.bf16.msra.mxu0 %v2059
        %2130 = vmatpush.bf16.msra.mxu0 %v2058
        %2131 = vmatpush.bf16.msra.mxu0 %v2057
        %2132 = vmatpush.bf16.msra.mxu0 %v2056
        %2133 = vmatmul.bf16.gmra.mxu0 %v1849
        %v2134 = vpop.f32.mrf.mxu0
        %v2135 = vadd.f32 %v2122, %v2134
        %v2136 = vpop.f32.mrf.mxu0
        %2137 = vdwg.mxu0
        %2138 = vmatpush.bf16.msra.mxu0 %v2071
        %2139 = vmatpush.bf16.msra.mxu0 %v2070
        %2140 = vmatpush.bf16.msra.mxu0 %v2069
        %2141 = vmatpush.bf16.msra.mxu0 %v2068
        %2142 = vmatpush.bf16.msra.mxu0 %v2067
        %2143 = vmatpush.bf16.msra.mxu0 %v2066
        %2144 = vmatpush.bf16.msra.mxu0 %v2065
        %2145 = vmatpush.bf16.msra.mxu0 %v2064
        %2146 = vmatmul.bf16.gmra.mxu0 %v1850
        %v2147 = vpop.f32.mrf.mxu0
        %v2148 = vadd.f32 %v2135, %v2147
        %v2149 = vpop.f32.mrf.mxu0
        %2150 = vdwg.mxu0
        %2151 = vmatpush.bf16.msra.mxu0 %v2079
        %2152 = vmatpush.bf16.msra.mxu0 %v2078
        %2153 = vmatpush.bf16.msra.mxu0 %v2077
        %2154 = vmatpush.bf16.msra.mxu0 %v2076
        %2155 = vmatpush.bf16.msra.mxu0 %v2075
        %2156 = vmatpush.bf16.msra.mxu0 %v2074
        %2157 = vmatpush.bf16.msra.mxu0 %v2073
        %2158 = vmatpush.bf16.msra.mxu0 %v2072
        %2159 = vmatmul.bf16.gmra.mxu0 %v1851
        %v2160 = vpop.f32.mrf.mxu0
        %v2161 = vadd.f32 %v2148, %v2160
        %v2162 = vpop.f32.mrf.mxu0
        %2163 = vdwg.mxu0
        %v2164 = vadd.f32 %v2161, %v1432
        %v2165 = vld [vmem:[%s796] sm:$0x1]
        %v2166 = vld [vmem:[%s799] sm:$0x1]
        %2167 = vadd.xlane.f32.xlu0 %v2164
        %v2168 = vpop.xlane.xlu0 %2167
        %v2169 = vmul.f32 %v2168, %v1406
        %v2170 = vsub.f32 %v2164, %v2169
        %v2171 = vmul.f32 %v2170, %v2170
        %2172 = vadd.xlane.f32.xlu0 %v2171
        %v2173 = vpop.xlane.xlu0 %2172
        %v2174 = vmul.f32 %v2173, %v1406
        %v2175 = vadd.f32 %v2174, 1e-12
        %v2176 = vrsqrt.pop %v2175
        %v2177 = vmul.f32 %v2176, %v2175
        %v2178 = vmul.f32 %v2177, %v2176
        %v2179 = vmul.f32 0.5, %v2178
        %v2180 = vsub.f32 1.5, %v2179
        %v2181 = vmul.f32 %v2176, %v2180
        %vm2182 = vweird.f32 %v2175
        %vm2183 = vweird.f32 %v2176
        %vm2184 = vmor %vm2182, %vm2183
        %v2185 = vsel %vm2184, %v2176, %v2181
        %v2186 = vmul.f32 %v2170, %v2185
        %v2188 = vperm.slane %v2165, 0
        %v2190 = vmul.f32 %v2186, %v2188
        %v2192 = vperm.slane %v2166, 0
        %v2194 = vadd.f32 %v2190, %v2192
        %2195 = vst [vmem:[%s803] sm:$0xff] %v2194
        %p2196 = scmp.lt.s32.totalorder %s37, 1
        %s2197 = scalar_select %p2196, %s37, 1
        %s2198 = smul.addr %s2197, 8
        %s2199 = scalar_lea.vmem %s16, %s2198
        // Predicated region
        $region101: #{forward.1} parent=83 // pred_check
          %p2200 = pneg %p469
        $region102: #{forward.1} parent=83 // pred_check_branch
          %2202 = sbr.rel (%p2200) target = $region104
        $region103: #{forward.1} parent=83 // pred_region
          _
        $region104: #{forward.1} parent=83 // pred_fallthru
          _
      $region84: #{forward.1} parent=5 // pred_fallthru
        _
      %p2203 = scmp.le.s32.totalorder 2, %s28
      // Predicated region
      $region105: #{forward.1} parent=5 // pred_check
        %p2204 = pneg %p2203
      $region106: #{forward.1} parent=5 // pred_check_branch
        %2206 = sbr.rel (%p2204) target = $region108
      $region107: #{forward.1} parent=5 // pred_region
        %s2207 = ssub.s32 %s28, 2
        // Predicated region
        $region109: #{forward.1} parent=107 // pred_check
          %p2208 = pneg %p475
        $region110: #{forward.1} parent=107 // pred_check_branch
          %2210 = sbr.rel (%p2208) target = $region112
        $region111: #{forward.1} parent=107 // pred_region
          %p2211 = scmp.lt.s32.totalorder %s39, 1
          %s2212 = scalar_select %p2211, %s39, 1
          %s2213 = smul.addr %s2212, 8
          %s2214 = scalar_lea.vmem %s16, %s2213
        $region112: #{forward.1} parent=107 // pred_fallthru
          _
      $region108: #{forward.1} parent=5 // pred_fallthru
        _
    $region6: #{forward.1} parent=1 // loop_footer
      %s32 = sadd.s32 1, %s28
    $region7: #{forward.1} parent=1 // loop_footer_branch
      %27 = sbr.rel target = $region3
    $region8: #{forward.1} parent=1 // loop_exit
      _
    %2215 = vsyncpa [#allocation3], 1
    %s2216 = scalar_lea.sflag [#allocation3], 1
    %2217 = vsyncpa %s2216, 1
    %2218 = vsyncpa [#allocation5], 1
    %s2219 = scalar_lea.sflag [#allocation5], 1
    %2220 = vsyncpa %s2219, 1

</llo_original>
